<compile_context>
chip_gen: v7x
topology: tpu7x:2x2x1
jax: 0.10.0
libtpu: 0.0.40
codegen_flags: <defaults>
</compile_context>

<pallas_src>
import jax
import jax.numpy as jnp
from jax.experimental import pallas as pl
from jax.experimental.pallas import tpu as pltpu


# ---------------------------------------------------------------------------
# Fused BasicBlock kernel body
# ---------------------------------------------------------------------------
def _block_body(xph_ref, w1_ref, b1_ref, w2_ref, b2_ref, out_ref,
                t1_ref, y1pad_ref, t2_ref, *, stride, Ho, Wo, has_proj):
    s = stride
    HW = Ho * Wo
    Cin = xph_ref.shape[-1]
    P = w2_ref.shape[-1]
    Hq = xph_ref.shape[1] // (s * s)

    # Zero the persistent padded-y1 scratch ONCE: interior is overwritten every
    # grid step, only the 1-px border must stay zero (scratch persists).
    @pl.when(pl.program_id(0) == 0)
    def _():
        y1pad_ref[...] = jnp.zeros_like(y1pad_ref)

    def x_window(kh, kw):
        # Contiguous window of the phase-decomposed padded bf16 input:
        # element (ho, wo) == x_pad[s*ho + kh, s*wo + kw, :]
        ph, pw = kh % s, kw % s
        qh, qw = kh // s, kw // s
        r0 = (ph * s + pw) * Hq + qh
        return xph_ref[0, r0:r0 + Ho, qw:qw + Wo, :].reshape(HW, Cin)

    # ---- im2col for conv1: 9 taps written straight into the VMEM scratch ----
    center = None
    for kh in range(3):
        for kw in range(3):
            k = kh * 3 + kw
            win = x_window(kh, kw)                       # (HW, Cin) bf16
            if k == 4:
                center = win                             # reused by shortcut
            t1_ref[:, k * Cin:(k + 1) * Cin] = win

    # ---- conv1+bn1 (+ fused 1x1 projection shortcut): ONE bf16 MXU matmul ---
    y = jnp.dot(t1_ref[...], w1_ref[...],
                preferred_element_type=jnp.float32) + b1_ref[...]
    y1 = jnp.maximum(y[:, :P], 0.0)                      # (HW, P) f32
    if has_proj:
        sc = y[:, P:]                                    # projection + folded BN
    else:
        sc = center.astype(jnp.float32)                  # identity (Cin == P)

    # ---- stage padded y1 in VMEM (interior only; border stays zero) ---------
    y1pad_ref[1:Ho + 1, 1:Wo + 1, :] = (
        y1.reshape(Ho, Wo, P).astype(y1pad_ref.dtype))

    # ---- im2col for conv2 (stride 1) -----------------------------------------
    for kh in range(3):
        for kw in range(3):
            k = kh * 3 + kw
            t2_ref[:, k * P:(k + 1) * P] = (
                y1pad_ref[kh:kh + Ho, kw:kw + Wo, :].reshape(HW, P))

    # ---- conv2+bn2 + residual + ReLU -----------------------------------------
    y2 = jnp.dot(t2_ref[...], w2_ref[...],
                 preferred_element_type=jnp.float32) + b2_ref[...]
    out = jnp.maximum(y2 + sc, 0.0)                      # (HW, P) f32
    out_ref[0] = out.T.astype(out_ref.dtype)             # lane-dense NCHW store


def _make_kernel(stride, Ho, Wo, has_proj):
    def kernel(xph, w1, b1, w2, b2, out, t1, y1pad, t2):
        _block_body(xph, w1, b1, w2, b2, out, t1, y1pad, t2,
                    stride=stride, Ho=Ho, Wo=Wo, has_proj=has_proj)
    return kernel


# ---------------------------------------------------------------------------
# Host-side prep: BN folding, phase layout, pallas_call wrapper
# ---------------------------------------------------------------------------
def _fold_conv_bn(w_oihw, bn, eps=1e-5):
    """Fold inference BatchNorm into the conv weight.

    Returns a (KH*KW*Cin, Cout) f32 matmul weight (tap-major rows, matching
    the kernel's tap order) and a (1, Cout) f32 bias.
    """
    gamma, beta, mean, var = bn
    scale = gamma / jnp.sqrt(var + eps)                      # (Cout,)
    Cout, Cin, KH, KW = w_oihw.shape
    w_mat = jnp.transpose(w_oihw, (2, 3, 1, 0)).reshape(KH * KW * Cin, Cout)
    return w_mat * scale[None, :], (beta - mean * scale)[None, :]


def _phase_layout(x_nhwc, stride):
    """Zero-pad by 1, extend to a stride multiple, fold the stride phases so
    every conv tap is a plain contiguous slice in-kernel, and cast to bf16.
    Returns (B, s*s*Hq, Wq, C) with row ((ph*s+pw)*Hq + i), col j equal to
    x_pad[s*i+ph, s*j+pw]. The extra pad rows/cols (for odd H/W) are never
    read by any valid output position."""
    B, H, W, C = x_nhwc.shape
    s = stride
    xp = jnp.pad(x_nhwc.astype(jnp.bfloat16), ((0, 0), (1, 1), (1, 1), (0, 0)))
    Hp, Wp = H + 2, W + 2
    eh, ew = (-Hp) % s, (-Wp) % s
    if eh or ew:
        xp = jnp.pad(xp, ((0, 0), (0, eh), (0, ew), (0, 0)))
    Hq, Wq = (Hp + eh) // s, (Wp + ew) // s
    if s == 1:
        return xp
    xph = xp.reshape(B, Hq, s, Wq, s, C).transpose(0, 2, 4, 1, 3, 5)
    return xph.reshape(B, s * s * Hq, Wq, C)


def _vmem_limit_bytes():
    cap = 128 * 1024 * 1024
    try:
        cap = int(getattr(pltpu.get_tpu_info(), "vmem_capacity_bytes", cap))
    except Exception:
        pass
    if cap >= 100 * 1024 * 1024:          # v5e / v6e: 128 MiB physical
        return 96 * 1024 * 1024
    return (cap * 5) // 8                 # v7x: 64 MiB physical -> ~40 MiB


def basic_block_forward(x_nchw, params, stride, out_dtype=jnp.float32):
    """Pallas implementation of BasicBlock.forward (inference BN). x: NCHW f32."""
    B, Cin, H, W = x_nchw.shape
    P = params["w1"].shape[0]
    s = stride
    Ho = (H - 1) // s + 1
    Wo = (W - 1) // s + 1
    HW = Ho * Wo
    has_proj = "wsc" in params

    x_nhwc = jnp.transpose(x_nchw, (0, 2, 3, 1))     # channels -> lane axis
    xph = _phase_layout(x_nhwc, s)                   # bf16, phase-decomposed

    w1m, b1 = _fold_conv_bn(params["w1"], params["bn1"])     # (9Cin, P), (1, P)
    w2m, b2 = _fold_conv_bn(params["w2"], params["bn2"])     # (9P,  P), (1, P)
    if has_proj:
        # Fuse the 1x1 projection shortcut into conv1: extra P output columns
        # whose only nonzero rows are the centre tap (= x[s*ho, s*wo]).
        wscm, bsc = _fold_conv_bn(params["wsc"], params["bnsc"])   # (Cin, P)
        w1c = jnp.zeros((9 * Cin, 2 * P), jnp.float32)
        w1c = w1c.at[:, :P].set(w1m).at[4 * Cin:5 * Cin, P:].set(wscm)
        b1c = jnp.concatenate([b1, bsc], axis=1)
    else:
        w1c, b1c = w1m, b1
    w1c = w1c.astype(jnp.bfloat16)
    w2m = w2m.astype(jnp.bfloat16)
    b1c = b1c.astype(jnp.float32)
    b2 = b2.astype(jnp.float32)

    full2 = lambda b: (0, 0)
    out = pl.pallas_call(
        _make_kernel(s, Ho, Wo, has_proj),
        out_shape=jax.ShapeDtypeStruct((B, P, HW), out_dtype),
        grid=(B,),
        in_specs=[
            pl.BlockSpec((1,) + xph.shape[1:], lambda b: (b, 0, 0, 0)),
            pl.BlockSpec(w1c.shape, full2),
            pl.BlockSpec(b1c.shape, full2),
            pl.BlockSpec(w2m.shape, full2),
            pl.BlockSpec(b2.shape, full2),
        ],
        out_specs=pl.BlockSpec((1, P, HW), lambda b: (b, 0, 0)),
        scratch_shapes=[
            pltpu.VMEM((HW, 9 * Cin), jnp.bfloat16),        # conv1 im2col
            pltpu.VMEM((Ho + 2, Wo + 2, P), jnp.bfloat16),  # padded y1
            pltpu.VMEM((HW, 9 * P), jnp.bfloat16),          # conv2 im2col
        ],
        compiler_params=pltpu.CompilerParams(
            dimension_semantics=("parallel",),
            vmem_limit_bytes=_vmem_limit_bytes()),
    )(xph, w1c, b1c, w2m, b2)

    return out.reshape(B, P, Ho, Wo)     # already NCHW


# ---------------------------------------------------------------------------
# Deterministic parameters (inference-mode BatchNorm statistics)
# ---------------------------------------------------------------------------
def init_basic_block_params(key, in_planes, planes, stride):
    ks = jax.random.split(key, 12)
    p = {
        "w1": jax.random.normal(ks[0], (planes, in_planes, 3, 3), jnp.float32) * 0.1,
        "bn1": (jax.random.uniform(ks[1], (planes,), minval=0.5, maxval=1.5),
                jax.random.normal(ks[2], (planes,)) * 0.1,
                jax.random.normal(ks[3], (planes,)) * 0.1,
                jax.random.uniform(ks[4], (planes,), minval=0.5, maxval=1.5)),
        "w2": jax.random.normal(ks[5], (planes, planes, 3, 3), jnp.float32) * 0.1,
        "bn2": (jax.random.uniform(ks[6], (planes,), minval=0.5, maxval=1.5),
                jax.random.normal(ks[7], (planes,)) * 0.1,
                jax.random.normal(ks[8], (planes,)) * 0.1,
                jax.random.uniform(ks[9], (planes,), minval=0.5, maxval=1.5)),
    }
    if stride != 1 or in_planes != planes:   # expansion == 1
        p["wsc"] = jax.random.normal(ks[10], (planes, in_planes, 1, 1),
                                     jnp.float32) * 0.1
        p["bnsc"] = (jax.random.uniform(ks[11], (planes,), minval=0.5, maxval=1.5),
                     jnp.zeros((planes,)) + 0.05,
                     jnp.zeros((planes,)) - 0.02,
                     jnp.ones((planes,)) * 0.9)
    return p


# ---------------------------------------------------------------------------
# Pure-JAX reference (f32 lax.conv) for correctness check
# ---------------------------------------------------------------------------
def _ref_forward(x, p, stride):
    def conv(x, w, s, pad):
        return jax.lax.conv_general_dilated(
            x, w, (s, s), ((pad, pad), (pad, pad)),
            dimension_numbers=("NCHW", "OIHW", "NCHW"))

    def bn(x, bnp):
        gamma, beta, mean, var = bnp
        sc = gamma / jnp.sqrt(var + 1e-5)
        return x * sc[None, :, None, None] + (beta - mean * sc)[None, :, None, None]

    out = jax.nn.relu(bn(conv(x, p["w1"], stride, 1), p["bn1"]))
    out = bn(conv(out, p["w2"], 1, 1), p["bn2"])
    if "wsc" in p:
        sc = bn(conv(x, p["wsc"], stride, 0), p["bnsc"])
    else:
        sc = x
    return jax.nn.relu(out + sc)


if __name__ == "__main__":
    key = jax.random.PRNGKey(0)
    k_x1, k_p1, k_x2, k_p2, k_x3, k_p3 = jax.random.split(key, 6)

    def check(out, ref):
        # bf16 MXU operands / bf16 input -> compare with a relative tolerance.
        err = jnp.max(jnp.abs(out - ref) / (1.0 + jnp.abs(ref)))
        assert float(err) < 0.1, float(err)

    # Case 1: stride=2, in_planes != planes -> fused 1x1 projection shortcut
    x1 = jax.random.normal(k_x1, (2, 8, 16, 16), jnp.float32)
    p1 = init_basic_block_params(k_p1, in_planes=8, planes=16, stride=2)
    out1 = jax.block_until_ready(basic_block_forward(x1, p1, stride=2))
    assert out1.shape == (2, 16, 8, 8), out1.shape
    check(out1, _ref_forward(x1, p1, 2))

    # Case 2: stride=1, in_planes == planes -> identity shortcut path
    x2 = jax.random.normal(k_x2, (2, 16, 16, 16), jnp.float32)
    p2 = init_basic_block_params(k_p2, in_planes=16, planes=16, stride=1)
    out2 = jax.block_until_ready(basic_block_forward(x2, p2, stride=1))
    assert out2.shape == (2, 16, 16, 16), out2.shape
    check(out2, _ref_forward(x2, p2, 1))

    # Case 3: stride=2 with odd H/W (arbitrary frame counts) -> previously a
    # trace-time assert, now handled by the stride-multiple zero extension.
    x3 = jax.random.normal(k_x3, (1, 8, 15, 13), jnp.float32)
    p3 = init_basic_block_params(k_p3, in_planes=8, planes=16, stride=2)
    out3 = jax.block_until_ready(basic_block_forward(x3, p3, stride=2))
    assert out3.shape == (1, 16, 8, 7), out3.shape
    check(out3, _ref_forward(x3, p3, 2))

    print("KERNEL_OK")
</pallas_src>

<mosaic_0001>
module attributes {stable_mosaic.version = 11 : i64} {
  func.func @kernel(%arg0: i32, %arg1: memref<1x36x9x8xbf16, #tpu.memory_space<vmem>>, %arg2: memref<72x32xbf16, #tpu.memory_space<vmem>>, %arg3: memref<1x32xf32, #tpu.memory_space<vmem>>, %arg4: memref<144x16xbf16, #tpu.memory_space<vmem>>, %arg5: memref<1x16xf32, #tpu.memory_space<vmem>>, %arg6: memref<1x16x64xf32, #tpu.memory_space<vmem>>, %arg7: memref<64x72xbf16, #tpu.memory_space<vmem>>, %arg8: memref<10x10x16xbf16, #tpu.memory_space<vmem>>, %arg9: memref<64x144xbf16, #tpu.memory_space<vmem>>) attributes {dimension_semantics = [#tpu.dimension_semantics<parallel>], iteration_bounds = array<i64: 2>, scalar_prefetch = 0 : i64, scratch_operands = 3 : i64, tpu.core_type = #tpu.core_type<tc>, window_params = [{transform_indices = @transform_0, window_bounds = array<i64: 1, 36, 9, 8>}, {pipeline_mode = #tpu.pipeline_mode<synchronous>, transform_indices = @transform_1, window_bounds = array<i64: 72, 32>}, {pipeline_mode = #tpu.pipeline_mode<synchronous>, transform_indices = @transform_2, window_bounds = array<i64: 1, 32>}, {pipeline_mode = #tpu.pipeline_mode<synchronous>, transform_indices = @transform_3, window_bounds = array<i64: 144, 16>}, {pipeline_mode = #tpu.pipeline_mode<synchronous>, transform_indices = @transform_4, window_bounds = array<i64: 1, 16>}, {transform_indices = @transform_5, window_bounds = array<i64: 1, 16, 64>}]} {
    %c0_i32 = arith.constant 0 : i32
    %0 = arith.cmpi eq, %arg0, %c0_i32 : i32
    %1 = arith.extui %0 : i1 to i32
    %c0_i32_0 = arith.constant 0 : i32
    %2 = arith.cmpi ne, %1, %c0_i32_0 : i32
    scf.if %2 {
      %cst_102 = arith.constant 0.000000e+00 : bf16
      %92 = vector.broadcast %cst_102 : bf16 to vector<10x10x16xbf16>
      %c0_103 = arith.constant 0 : index
      %c0_104 = arith.constant 0 : index
      %c0_105 = arith.constant 0 : index
      %93 = vector.load %arg8[%c0_103, %c0_104, %c0_105] : memref<10x10x16xbf16, #tpu.memory_space<vmem>>, vector<10x10x16xbf16>
      tpu.vector_store %arg8[%c0_103, %c0_104, %c0_105], %92 {strides = array<i32>} : memref<10x10x16xbf16, #tpu.memory_space<vmem>>, vector<10x10x16xbf16>,
    } else {
    }
    %c0 = arith.constant 0 : index
    %c0_1 = arith.constant 0 : index
    %c0_2 = arith.constant 0 : index
    %c0_3 = arith.constant 0 : index
    %3 = vector.load %arg1[%c0, %c0_1, %c0_2, %c0_3] : memref<1x36x9x8xbf16, #tpu.memory_space<vmem>>, vector<1x8x8x8xbf16>
    %4 = vector.shape_cast %3 : vector<1x8x8x8xbf16> to vector<8x8x8xbf16>
    %5 = vector.shape_cast %4 : vector<8x8x8xbf16> to vector<64x8xbf16>
    %c0_4 = arith.constant 0 : index
    %c0_5 = arith.constant 0 : index
    %6 = vector.load %arg7[%c0_4, %c0_5] : memref<64x72xbf16, #tpu.memory_space<vmem>>, vector<64x8xbf16>
    tpu.vector_store %arg7[%c0_4, %c0_5], %5 {strides = array<i32>} : memref<64x72xbf16, #tpu.memory_space<vmem>>, vector<64x8xbf16>,
    %c0_6 = arith.constant 0 : index
    %c9 = arith.constant 9 : index
    %c0_7 = arith.constant 0 : index
    %c0_8 = arith.constant 0 : index
    %7 = vector.load %arg1[%c0_6, %c9, %c0_7, %c0_8] : memref<1x36x9x8xbf16, #tpu.memory_space<vmem>>, vector<1x8x8x8xbf16>
    %8 = vector.shape_cast %7 : vector<1x8x8x8xbf16> to vector<8x8x8xbf16>
    %9 = vector.shape_cast %8 : vector<8x8x8xbf16> to vector<64x8xbf16>
    %c0_9 = arith.constant 0 : index
    %c8 = arith.constant 8 : index
    %10 = vector.load %arg7[%c0_9, %c8] : memref<64x72xbf16, #tpu.memory_space<vmem>>, vector<64x8xbf16>
    tpu.vector_store %arg7[%c0_9, %c8], %9 {strides = array<i32>} : memref<64x72xbf16, #tpu.memory_space<vmem>>, vector<64x8xbf16>,
    %c0_10 = arith.constant 0 : index
    %c0_11 = arith.constant 0 : index
    %c1 = arith.constant 1 : index
    %c0_12 = arith.constant 0 : index
    %11 = vector.load %arg1[%c0_10, %c0_11, %c1, %c0_12] : memref<1x36x9x8xbf16, #tpu.memory_space<vmem>>, vector<1x8x8x8xbf16>
    %12 = vector.shape_cast %11 : vector<1x8x8x8xbf16> to vector<8x8x8xbf16>
    %13 = vector.shape_cast %12 : vector<8x8x8xbf16> to vector<64x8xbf16>
    %c0_13 = arith.constant 0 : index
    %c16 = arith.constant 16 : index
    %14 = vector.load %arg7[%c0_13, %c16] : memref<64x72xbf16, #tpu.memory_space<vmem>>, vector<64x8xbf16>
    tpu.vector_store %arg7[%c0_13, %c16], %13 {strides = array<i32>} : memref<64x72xbf16, #tpu.memory_space<vmem>>, vector<64x8xbf16>,
    %c0_14 = arith.constant 0 : index
    %c18 = arith.constant 18 : index
    %c0_15 = arith.constant 0 : index
    %c0_16 = arith.constant 0 : index
    %15 = vector.load %arg1[%c0_14, %c18, %c0_15, %c0_16] : memref<1x36x9x8xbf16, #tpu.memory_space<vmem>>, vector<1x8x8x8xbf16>
    %16 = vector.shape_cast %15 : vector<1x8x8x8xbf16> to vector<8x8x8xbf16>
    %17 = vector.shape_cast %16 : vector<8x8x8xbf16> to vector<64x8xbf16>
    %c0_17 = arith.constant 0 : index
    %c24 = arith.constant 24 : index
    %18 = vector.load %arg7[%c0_17, %c24] : memref<64x72xbf16, #tpu.memory_space<vmem>>, vector<64x8xbf16>
    tpu.vector_store %arg7[%c0_17, %c24], %17 {strides = array<i32>} : memref<64x72xbf16, #tpu.memory_space<vmem>>, vector<64x8xbf16>,
    %c0_18 = arith.constant 0 : index
    %c27 = arith.constant 27 : index
    %c0_19 = arith.constant 0 : index
    %c0_20 = arith.constant 0 : index
    %19 = vector.load %arg1[%c0_18, %c27, %c0_19, %c0_20] : memref<1x36x9x8xbf16, #tpu.memory_space<vmem>>, vector<1x8x8x8xbf16>
    %20 = vector.shape_cast %19 : vector<1x8x8x8xbf16> to vector<8x8x8xbf16>
    %21 = vector.shape_cast %20 : vector<8x8x8xbf16> to vector<64x8xbf16>
    %c0_21 = arith.constant 0 : index
    %c32 = arith.constant 32 : index
    %22 = vector.load %arg7[%c0_21, %c32] : memref<64x72xbf16, #tpu.memory_space<vmem>>, vector<64x8xbf16>
    tpu.vector_store %arg7[%c0_21, %c32], %21 {strides = array<i32>} : memref<64x72xbf16, #tpu.memory_space<vmem>>, vector<64x8xbf16>,
    %c0_22 = arith.constant 0 : index
    %c18_23 = arith.constant 18 : index
    %c1_24 = arith.constant 1 : index
    %c0_25 = arith.constant 0 : index
    %23 = vector.load %arg1[%c0_22, %c18_23, %c1_24, %c0_25] : memref<1x36x9x8xbf16, #tpu.memory_space<vmem>>, vector<1x8x8x8xbf16>
    %24 = vector.shape_cast %23 : vector<1x8x8x8xbf16> to vector<8x8x8xbf16>
    %25 = vector.shape_cast %24 : vector<8x8x8xbf16> to vector<64x8xbf16>
    %c0_26 = arith.constant 0 : index
    %c40 = arith.constant 40 : index
    %26 = vector.load %arg7[%c0_26, %c40] : memref<64x72xbf16, #tpu.memory_space<vmem>>, vector<64x8xbf16>
    tpu.vector_store %arg7[%c0_26, %c40], %25 {strides = array<i32>} : memref<64x72xbf16, #tpu.memory_space<vmem>>, vector<64x8xbf16>,
    %c0_27 = arith.constant 0 : index
    %c1_28 = arith.constant 1 : index
    %c0_29 = arith.constant 0 : index
    %c0_30 = arith.constant 0 : index
    %27 = vector.load %arg1[%c0_27, %c1_28, %c0_29, %c0_30] : memref<1x36x9x8xbf16, #tpu.memory_space<vmem>>, vector<1x8x8x8xbf16>
    %28 = vector.shape_cast %27 : vector<1x8x8x8xbf16> to vector<8x8x8xbf16>
    %29 = vector.shape_cast %28 : vector<8x8x8xbf16> to vector<64x8xbf16>
    %c0_31 = arith.constant 0 : index
    %c48 = arith.constant 48 : index
    %30 = vector.load %arg7[%c0_31, %c48] : memref<64x72xbf16, #tpu.memory_space<vmem>>, vector<64x8xbf16>
    tpu.vector_store %arg7[%c0_31, %c48], %29 {strides = array<i32>} : memref<64x72xbf16, #tpu.memory_space<vmem>>, vector<64x8xbf16>,
    %c0_32 = arith.constant 0 : index
    %c10 = arith.constant 10 : index
    %c0_33 = arith.constant 0 : index
    %c0_34 = arith.constant 0 : index
    %31 = vector.load %arg1[%c0_32, %c10, %c0_33, %c0_34] : memref<1x36x9x8xbf16, #tpu.memory_space<vmem>>, vector<1x8x8x8xbf16>
    %32 = vector.shape_cast %31 : vector<1x8x8x8xbf16> to vector<8x8x8xbf16>
    %33 = vector.shape_cast %32 : vector<8x8x8xbf16> to vector<64x8xbf16>
    %c0_35 = arith.constant 0 : index
    %c56 = arith.constant 56 : index
    %34 = vector.load %arg7[%c0_35, %c56] : memref<64x72xbf16, #tpu.memory_space<vmem>>, vector<64x8xbf16>
    tpu.vector_store %arg7[%c0_35, %c56], %33 {strides = array<i32>} : memref<64x72xbf16, #tpu.memory_space<vmem>>, vector<64x8xbf16>,
    %c0_36 = arith.constant 0 : index
    %c1_37 = arith.constant 1 : index
    %c1_38 = arith.constant 1 : index
    %c0_39 = arith.constant 0 : index
    %35 = vector.load %arg1[%c0_36, %c1_37, %c1_38, %c0_39] : memref<1x36x9x8xbf16, #tpu.memory_space<vmem>>, vector<1x8x8x8xbf16>
    %36 = vector.shape_cast %35 : vector<1x8x8x8xbf16> to vector<8x8x8xbf16>
    %37 = vector.shape_cast %36 : vector<8x8x8xbf16> to vector<64x8xbf16>
    %c0_40 = arith.constant 0 : index
    %c64 = arith.constant 64 : index
    %38 = vector.load %arg7[%c0_40, %c64] : memref<64x72xbf16, #tpu.memory_space<vmem>>, vector<64x8xbf16>
    tpu.vector_store %arg7[%c0_40, %c64], %37 {strides = array<i32>} : memref<64x72xbf16, #tpu.memory_space<vmem>>, vector<64x8xbf16>,
    %c0_41 = arith.constant 0 : index
    %c0_42 = arith.constant 0 : index
    %39 = vector.load %arg7[%c0_41, %c0_42] : memref<64x72xbf16, #tpu.memory_space<vmem>>, vector<64x72xbf16>
    %c0_43 = arith.constant 0 : index
    %c0_44 = arith.constant 0 : index
    %40 = vector.load %arg2[%c0_43, %c0_44] : memref<72x32xbf16, #tpu.memory_space<vmem>>, vector<72x32xbf16>
    %cst = arith.constant dense<0.000000e+00> : vector<64x32xf32>
    %41 = tpu.matmul %39, %40, %cst {dimension_numbers = #tpu.dot_dimension_numbers<[1], [0], [0], [1], [0, 0, 1, 1], [], []>} : vector<64x72xbf16>, vector<72x32xbf16>, vector<64x32xf32> -> vector<64x32xf32>
    %c0_45 = arith.constant 0 : index
    %c0_46 = arith.constant 0 : index
    %42 = vector.load %arg3[%c0_45, %c0_46] : memref<1x32xf32, #tpu.memory_space<vmem>>, vector<1x32xf32>
    %43 = vector.broadcast %42 : vector<1x32xf32> to vector<64x32xf32>
    %44 = arith.addf %41, %43 : vector<64x32xf32>
    %45 = vector.extract_strided_slice %44 {offsets = [0, 0], sizes = [64, 16], strides = [1, 1]} : vector<64x32xf32> to vector<64x16xf32>
    %cst_47 = arith.constant 0.000000e+00 : f32
    %46 = vector.broadcast %cst_47 : f32 to vector<64x16xf32>
    %47 = arith.maximumf %45, %46 : vector<64x16xf32>
    %48 = vector.extract_strided_slice %44 {offsets = [0, 16], sizes = [64, 16], strides = [1, 1]} : vector<64x32xf32> to vector<64x16xf32>
    %49 = vector.shape_cast %47 : vector<64x16xf32> to vector<8x8x16xf32>
    %50 = arith.truncf %49 : vector<8x8x16xf32> to vector<8x8x16xbf16>
    %c1_48 = arith.constant 1 : index
    %c1_49 = arith.constant 1 : index
    %c0_50 = arith.constant 0 : index
    %51 = vector.load %arg8[%c1_48, %c1_49, %c0_50] : memref<10x10x16xbf16, #tpu.memory_space<vmem>>, vector<8x8x16xbf16>
    tpu.vector_store %arg8[%c1_48, %c1_49, %c0_50], %50 {strides = array<i32>} : memref<10x10x16xbf16, #tpu.memory_space<vmem>>, vector<8x8x16xbf16>,
    %c0_51 = arith.constant 0 : index
    %c0_52 = arith.constant 0 : index
    %c0_53 = arith.constant 0 : index
    %52 = vector.load %arg8[%c0_51, %c0_52, %c0_53] : memref<10x10x16xbf16, #tpu.memory_space<vmem>>, vector<8x8x16xbf16>
    %53 = vector.shape_cast %52 : vector<8x8x16xbf16> to vector<64x16xbf16>
    %c0_54 = arith.constant 0 : index
    %c0_55 = arith.constant 0 : index
    %54 = vector.load %arg9[%c0_54, %c0_55] : memref<64x144xbf16, #tpu.memory_space<vmem>>, vector<64x16xbf16>
    tpu.vector_store %arg9[%c0_54, %c0_55], %53 {strides = array<i32>} : memref<64x144xbf16, #tpu.memory_space<vmem>>, vector<64x16xbf16>,
    %c0_56 = arith.constant 0 : index
    %c1_57 = arith.constant 1 : index
    %c0_58 = arith.constant 0 : index
    %55 = vector.load %arg8[%c0_56, %c1_57, %c0_58] : memref<10x10x16xbf16, #tpu.memory_space<vmem>>, vector<8x8x16xbf16>
    %56 = vector.shape_cast %55 : vector<8x8x16xbf16> to vector<64x16xbf16>
    %c0_59 = arith.constant 0 : index
    %c16_60 = arith.constant 16 : index
    %57 = vector.load %arg9[%c0_59, %c16_60] : memref<64x144xbf16, #tpu.memory_space<vmem>>, vector<64x16xbf16>
    tpu.vector_store %arg9[%c0_59, %c16_60], %56 {strides = array<i32>} : memref<64x144xbf16, #tpu.memory_space<vmem>>, vector<64x16xbf16>,
    %c0_61 = arith.constant 0 : index
    %c2 = arith.constant 2 : index
    %c0_62 = arith.constant 0 : index
    %58 = vector.load %arg8[%c0_61, %c2, %c0_62] : memref<10x10x16xbf16, #tpu.memory_space<vmem>>, vector<8x8x16xbf16>
    %59 = vector.shape_cast %58 : vector<8x8x16xbf16> to vector<64x16xbf16>
    %c0_63 = arith.constant 0 : index
    %c32_64 = arith.constant 32 : index
    %60 = vector.load %arg9[%c0_63, %c32_64] : memref<64x144xbf16, #tpu.memory_space<vmem>>, vector<64x16xbf16>
    tpu.vector_store %arg9[%c0_63, %c32_64], %59 {strides = array<i32>} : memref<64x144xbf16, #tpu.memory_space<vmem>>, vector<64x16xbf16>,
    %c1_65 = arith.constant 1 : index
    %c0_66 = arith.constant 0 : index
    %c0_67 = arith.constant 0 : index
    %61 = vector.load %arg8[%c1_65, %c0_66, %c0_67] : memref<10x10x16xbf16, #tpu.memory_space<vmem>>, vector<8x8x16xbf16>
    %62 = vector.shape_cast %61 : vector<8x8x16xbf16> to vector<64x16xbf16>
    %c0_68 = arith.constant 0 : index
    %c48_69 = arith.constant 48 : index
    %63 = vector.load %arg9[%c0_68, %c48_69] : memref<64x144xbf16, #tpu.memory_space<vmem>>, vector<64x16xbf16>
    tpu.vector_store %arg9[%c0_68, %c48_69], %62 {strides = array<i32>} : memref<64x144xbf16, #tpu.memory_space<vmem>>, vector<64x16xbf16>,
    %c1_70 = arith.constant 1 : index
    %c1_71 = arith.constant 1 : index
    %c0_72 = arith.constant 0 : index
    %64 = vector.load %arg8[%c1_70, %c1_71, %c0_72] : memref<10x10x16xbf16, #tpu.memory_space<vmem>>, vector<8x8x16xbf16>
    %65 = vector.shape_cast %64 : vector<8x8x16xbf16> to vector<64x16xbf16>
    %c0_73 = arith.constant 0 : index
    %c64_74 = arith.constant 64 : index
    %66 = vector.load %arg9[%c0_73, %c64_74] : memref<64x144xbf16, #tpu.memory_space<vmem>>, vector<64x16xbf16>
    tpu.vector_store %arg9[%c0_73, %c64_74], %65 {strides = array<i32>} : memref<64x144xbf16, #tpu.memory_space<vmem>>, vector<64x16xbf16>,
    %c1_75 = arith.constant 1 : index
    %c2_76 = arith.constant 2 : index
    %c0_77 = arith.constant 0 : index
    %67 = vector.load %arg8[%c1_75, %c2_76, %c0_77] : memref<10x10x16xbf16, #tpu.memory_space<vmem>>, vector<8x8x16xbf16>
    %68 = vector.shape_cast %67 : vector<8x8x16xbf16> to vector<64x16xbf16>
    %c0_78 = arith.constant 0 : index
    %c80 = arith.constant 80 : index
    %69 = vector.load %arg9[%c0_78, %c80] : memref<64x144xbf16, #tpu.memory_space<vmem>>, vector<64x16xbf16>
    tpu.vector_store %arg9[%c0_78, %c80], %68 {strides = array<i32>} : memref<64x144xbf16, #tpu.memory_space<vmem>>, vector<64x16xbf16>,
    %c2_79 = arith.constant 2 : index
    %c0_80 = arith.constant 0 : index
    %c0_81 = arith.constant 0 : index
    %70 = vector.load %arg8[%c2_79, %c0_80, %c0_81] : memref<10x10x16xbf16, #tpu.memory_space<vmem>>, vector<8x8x16xbf16>
    %71 = vector.shape_cast %70 : vector<8x8x16xbf16> to vector<64x16xbf16>
    %c0_82 = arith.constant 0 : index
    %c96 = arith.constant 96 : index
    %72 = vector.load %arg9[%c0_82, %c96] : memref<64x144xbf16, #tpu.memory_space<vmem>>, vector<64x16xbf16>
    tpu.vector_store %arg9[%c0_82, %c96], %71 {strides = array<i32>} : memref<64x144xbf16, #tpu.memory_space<vmem>>, vector<64x16xbf16>,
    %c2_83 = arith.constant 2 : index
    %c1_84 = arith.constant 1 : index
    %c0_85 = arith.constant 0 : index
    %73 = vector.load %arg8[%c2_83, %c1_84, %c0_85] : memref<10x10x16xbf16, #tpu.memory_space<vmem>>, vector<8x8x16xbf16>
    %74 = vector.shape_cast %73 : vector<8x8x16xbf16> to vector<64x16xbf16>
    %c0_86 = arith.constant 0 : index
    %c112 = arith.constant 112 : index
    %75 = vector.load %arg9[%c0_86, %c112] : memref<64x144xbf16, #tpu.memory_space<vmem>>, vector<64x16xbf16>
    tpu.vector_store %arg9[%c0_86, %c112], %74 {strides = array<i32>} : memref<64x144xbf16, #tpu.memory_space<vmem>>, vector<64x16xbf16>,
    %c2_87 = arith.constant 2 : index
    %c2_88 = arith.constant 2 : index
    %c0_89 = arith.constant 0 : index
    %76 = vector.load %arg8[%c2_87, %c2_88, %c0_89] : memref<10x10x16xbf16, #tpu.memory_space<vmem>>, vector<8x8x16xbf16>
    %77 = vector.shape_cast %76 : vector<8x8x16xbf16> to vector<64x16xbf16>
    %c0_90 = arith.constant 0 : index
    %c128 = arith.constant 128 : index
    %78 = vector.load %arg9[%c0_90, %c128] : memref<64x144xbf16, #tpu.memory_space<vmem>>, vector<64x16xbf16>
    tpu.vector_store %arg9[%c0_90, %c128], %77 {strides = array<i32>} : memref<64x144xbf16, #tpu.memory_space<vmem>>, vector<64x16xbf16>,
    %c0_91 = arith.constant 0 : index
    %c0_92 = arith.constant 0 : index
    %79 = vector.load %arg9[%c0_91, %c0_92] : memref<64x144xbf16, #tpu.memory_space<vmem>>, vector<64x144xbf16>
    %c0_93 = arith.constant 0 : index
    %c0_94 = arith.constant 0 : index
    %80 = vector.load %arg4[%c0_93, %c0_94] : memref<144x16xbf16, #tpu.memory_space<vmem>>, vector<144x16xbf16>
    %cst_95 = arith.constant dense<0.000000e+00> : vector<64x16xf32>
    %81 = tpu.matmul %79, %80, %cst_95 {dimension_numbers = #tpu.dot_dimension_numbers<[1], [0], [0], [1], [0, 0, 1, 1], [], []>} : vector<64x144xbf16>, vector<144x16xbf16>, vector<64x16xf32> -> vector<64x16xf32>
    %c0_96 = arith.constant 0 : index
    %c0_97 = arith.constant 0 : index
    %82 = vector.load %arg5[%c0_96, %c0_97] : memref<1x16xf32, #tpu.memory_space<vmem>>, vector<1x16xf32>
    %83 = vector.broadcast %82 : vector<1x16xf32> to vector<64x16xf32>
    %84 = arith.addf %81, %83 : vector<64x16xf32>
    %85 = arith.addf %84, %48 : vector<64x16xf32>
    %cst_98 = arith.constant 0.000000e+00 : f32
    %86 = vector.broadcast %cst_98 : f32 to vector<64x16xf32>
    %87 = arith.maximumf %85, %86 : vector<64x16xf32>
    %88 = tpu.transpose %87, [1, 0] : vector<64x16xf32> -> vector<16x64xf32>
    %c0_99 = arith.constant 0 : index
    %c0_100 = arith.constant 0 : index
    %c0_101 = arith.constant 0 : index
    %89 = vector.load %arg6[%c0_99, %c0_100, %c0_101] : memref<1x16x64xf32, #tpu.memory_space<vmem>>, vector<1x16x64xf32>
    %90 = vector.shape_cast %89 : vector<1x16x64xf32> to vector<16x64xf32>
    %91 = vector.shape_cast %88 : vector<16x64xf32> to vector<1x16x64xf32>
    tpu.vector_store %arg6[%c0_99, %c0_100, %c0_101], %91 {strides = array<i32>} : memref<1x16x64xf32, #tpu.memory_space<vmem>>, vector<1x16x64xf32>,
    return
  }
  func.func @transform_0(%arg0: i32) -> (i32, i32, i32, i32) {
    %c0_i32 = arith.constant 0 : i32
    %c0_i32_0 = arith.constant 0 : i32
    %c0_i32_1 = arith.constant 0 : i32
    %c0_i32_2 = arith.constant 0 : i32
    return %arg0, %c0_i32, %c0_i32_0, %c0_i32_1 : i32, i32, i32, i32
  }
  func.func @transform_1(%arg0: i32) -> (i32, i32) {
    %c0_i32 = arith.constant 0 : i32
    %c0_i32_0 = arith.constant 0 : i32
    %c0_i32_1 = arith.constant 0 : i32
    return %c0_i32, %c0_i32_0 : i32, i32
  }
  func.func @transform_2(%arg0: i32) -> (i32, i32) {
    %c0_i32 = arith.constant 0 : i32
    %c0_i32_0 = arith.constant 0 : i32
    %c0_i32_1 = arith.constant 0 : i32
    return %c0_i32, %c0_i32_0 : i32, i32
  }
  func.func @transform_3(%arg0: i32) -> (i32, i32) {
    %c0_i32 = arith.constant 0 : i32
    %c0_i32_0 = arith.constant 0 : i32
    %c0_i32_1 = arith.constant 0 : i32
    return %c0_i32, %c0_i32_0 : i32, i32
  }
  func.func @transform_4(%arg0: i32) -> (i32, i32) {
    %c0_i32 = arith.constant 0 : i32
    %c0_i32_0 = arith.constant 0 : i32
    %c0_i32_1 = arith.constant 0 : i32
    return %c0_i32, %c0_i32_0 : i32, i32
  }
  func.func @transform_5(%arg0: i32) -> (i32, i32, i32) {
    %c0_i32 = arith.constant 0 : i32
    %c0_i32_0 = arith.constant 0 : i32
    %c0_i32_1 = arith.constant 0 : i32
    return %arg0, %c0_i32, %c0_i32_0 : i32, i32, i32
  }
}

</mosaic_0001>

<llo_original>
// kernel: tpu_custom_call.1
$region0: #{tpu_custom_call.1}
  #allocation0 [shape = 'u32[]', space=smem, size = 0x4, offset = 0x4, fixed_abs, tag = 'smem constant byte address 0x4 - core index']
  #allocation1 [shape = 'u32[144,128]{1,0:T(1,128)}', space=vmem, size = 0x12000, scoped, tag = 'internal scratch']
  #allocation2 [shape = 'bf16[64,72]{1,0:T(16,128)(2,1)}', space=vmem, size = 0x4000, scoped, tag = 'scratch operand']
  #allocation3 [shape = 'bf16[10,10,16]{2,1,0:T(8,128)(2,1)}', space=vmem, size = 0xa000, scoped, tag = 'scratch operand']
  #allocation4 [shape = 'bf16[64,144]{1,0:T(16,128)(2,1)}', space=vmem, size = 0x8000, scoped, tag = 'scratch operand']
  %s0 = inlined_call_operand.hbm [shape: bf16[2,36,9,8], index: 0, kind: input, shape index: {}]
  %s1 = inlined_call_operand.hbm [shape: bf16[72,32], index: 1, kind: input, shape index: {}]
  %s2 = inlined_call_operand.hbm [shape: f32[1,32], index: 2, kind: input, shape index: {}]
  %s3 = inlined_call_operand.hbm [shape: bf16[144,16], index: 3, kind: input, shape index: {}]
  %s4 = inlined_call_operand.hbm [shape: f32[1,16], index: 4, kind: input, shape index: {}]
  %s5 = inlined_call_operand.hbm [shape: f32[2,16,64], index: 5, kind: output, shape index: {}]
  %s6 = sld [smem:[#allocation0]]
  $region77: #{tpu_custom_call.1} parent=0
    _
  %s8 = ssub.s32 1, %s6
  %s9 = scalar_select 0, %s8, %s6
  $region1: #{tpu_custom_call.1} parent=0
    #allocation5 [shape = 'u8[294912]{0}', space=vmem, size = 0x48000, scoped, tag = 'input window, operand 0']
    #allocation6 [shape = 's32[2]{0}', space=sflag, size = 0x8, scoped, tag = 'scoped memory for tpu_custom_call.1']
    #allocation7 [shape = 's32[2]{0}', space=sflag, size = 0x8, scoped, tag = 'scoped memory for tpu_custom_call.1']
    #allocation8 [shape = 'u8[18432]{0}', space=vmem, size = 0x4800, scoped, tag = 'input window, operand 1, single buffered']
    #allocation9 [shape = 's32[1]{0}', space=sflag, size = 0x4, scoped, tag = 'scoped memory for tpu_custom_call.1']
    #allocation10 [shape = 'u8[512]{0}', space=vmem, size = 0x400, scoped, tag = 'input window, operand 2, single buffered']
    #allocation11 [shape = 'u8[36864]{0}', space=vmem, size = 0x9000, scoped, tag = 'input window, operand 3, single buffered']
    #allocation12 [shape = 's32[1]{0}', space=sflag, size = 0x4, scoped, tag = 'scoped memory for tpu_custom_call.1']
    #allocation13 [shape = 'u8[512]{0}', space=vmem, size = 0x400, scoped, tag = 'input window, operand 4, single buffered']
    #allocation14 [shape = 'u8[16384]{0}', space=vmem, size = 0x4000, scoped, tag = 'output window, operand 0']
    %10 = vsyncpa [#allocation6], 0
    %s11 = scalar_lea.sflag [#allocation6], 1
    %12 = vsyncpa %s11, 0
    %13 = vsyncpa [#allocation9], 0
    %14 = vsyncpa [#allocation12], 0
    %15 = vsyncpa [#allocation7], 0
    %s16 = scalar_lea.sflag [#allocation7], 1
    %17 = vsyncpa %s16, 0
    loop: start=0, step=1, limit=4
    $region2: #{tpu_custom_call.1} parent=1 // loop_pre_header
      _
    $region3: #{tpu_custom_call.1} parent=1 // loop_header
      %s19 = sphi 0, %s23
      %p20 = scmp.ge.s32.totalorder %s19, 4
      %s29 = sphi 0, %s31
      %s32 = sphi 0, %s29
      %s33 = sphi 0, %s32
      %s49 = sphi 0, %s33
      %s53 = sphi 0, %s53
      %s55 = sphi 0, %s53
      %s56 = sphi 0, %s55
      %s70 = sphi 0, %s56
      %s74 = sphi 0, %s74
      %s76 = sphi 0, %s74
      %s77 = sphi 0, %s76
      %s91 = sphi 0, %s77
      %s95 = sphi 0, %s95
      %s97 = sphi 0, %s95
      %s98 = sphi 0, %s97
      %s112 = sphi 0, %s98
      %s116 = sphi 0, %s116
      %s118 = sphi 0, %s116
      %s119 = sphi 0, %s118
      %s133 = sphi 0, %s119
      %s139 = sphi 0, %s141
      %s142 = sphi 0, %s139
      %s143 = sphi 0, %s142
      %s159 = sphi 0, %s143
    $region4: #{tpu_custom_call.1} parent=1 // loop_header_branch
      %22 = sbr.rel (%p20) target = $region8
    $region5: #{tpu_custom_call.1} parent=1 // loop_body
      %s24 = ssub.s32 %s19, 1
      %s25 = ssub.s32 %s19, 2
      %s26 = sadd.s32 %s19, 1
      %s27 = ssub.s32 %s19, %s26
      %p28 = scmp.eq.s32.totalorder %s27, 0
      %s30 = sadd.s32 %s29, 1
      %s31 = scalar_select %p28, %s29, %s30
      %p34 = pneg %p28
      %p35 = scmp.eq.s32.totalorder %s19, 1
      %p36 = por %p34, %p35
      %p37 = scmp.ne.s32.totalorder %s29, %s32
      %p38 = scmp.eq.s32.totalorder %s19, 0
      %p39 = por %p37, %p38
      %p40 = scmp.ne.s32.totalorder %s29, %s32
      %p41 = scmp.eq.s32.totalorder %s24, 1
      %p42 = por %p40, %p41
      %p43 = scmp.ne.s32.totalorder %s32, %s33
      %p44 = scmp.eq.s32.totalorder %s24, 0
      %p45 = por %p43, %p44
      %p46 = scmp.ne.s32.totalorder %s32, %s33
      %p47 = scmp.eq.s32.totalorder %s25, 1
      %p48 = por %p46, %p47
      %p50 = scmp.ne.s32.totalorder %s33, %s49
      %p51 = scmp.eq.s32.totalorder %s25, 0
      %p52 = por %p50, %p51
      %s54 = sadd.s32 %s53, 1
      %p57 = scmp.eq.s32.totalorder %s19, 1
      %p58 = scmp.ne.s32.totalorder %s53, %s55
      %p59 = scmp.eq.s32.totalorder %s19, 0
      %p60 = por %p58, %p59
      %p61 = scmp.ne.s32.totalorder %s53, %s55
      %p62 = scmp.eq.s32.totalorder %s24, 1
      %p63 = por %p61, %p62
      %p64 = scmp.ne.s32.totalorder %s55, %s56
      %p65 = scmp.eq.s32.totalorder %s24, 0
      %p66 = por %p64, %p65
      %p67 = scmp.ne.s32.totalorder %s55, %s56
      %p68 = scmp.eq.s32.totalorder %s25, 1
      %p69 = por %p67, %p68
      %p71 = scmp.ne.s32.totalorder %s56, %s70
      %p72 = scmp.eq.s32.totalorder %s25, 0
      %p73 = por %p71, %p72
      %s75 = sadd.s32 %s74, 1
      %p78 = scmp.eq.s32.totalorder %s19, 1
      %p79 = scmp.ne.s32.totalorder %s74, %s76
      %p80 = scmp.eq.s32.totalorder %s19, 0
      %p81 = por %p79, %p80
      %p82 = scmp.ne.s32.totalorder %s74, %s76
      %p83 = scmp.eq.s32.totalorder %s24, 1
      %p84 = por %p82, %p83
      %p85 = scmp.ne.s32.totalorder %s76, %s77
      %p86 = scmp.eq.s32.totalorder %s24, 0
      %p87 = por %p85, %p86
      %p88 = scmp.ne.s32.totalorder %s76, %s77
      %p89 = scmp.eq.s32.totalorder %s25, 1
      %p90 = por %p88, %p89
      %p92 = scmp.ne.s32.totalorder %s77, %s91
      %p93 = scmp.eq.s32.totalorder %s25, 0
      %p94 = por %p92, %p93
      %s96 = sadd.s32 %s95, 1
      %p99 = scmp.eq.s32.totalorder %s19, 1
      %p100 = scmp.ne.s32.totalorder %s95, %s97
      %p101 = scmp.eq.s32.totalorder %s19, 0
      %p102 = por %p100, %p101
      %p103 = scmp.ne.s32.totalorder %s95, %s97
      %p104 = scmp.eq.s32.totalorder %s24, 1
      %p105 = por %p103, %p104
      %p106 = scmp.ne.s32.totalorder %s97, %s98
      %p107 = scmp.eq.s32.totalorder %s24, 0
      %p108 = por %p106, %p107
      %p109 = scmp.ne.s32.totalorder %s97, %s98
      %p110 = scmp.eq.s32.totalorder %s25, 1
      %p111 = por %p109, %p110
      %p113 = scmp.ne.s32.totalorder %s98, %s112
      %p114 = scmp.eq.s32.totalorder %s25, 0
      %p115 = por %p113, %p114
      %s117 = sadd.s32 %s116, 1
      %p120 = scmp.eq.s32.totalorder %s19, 1
      %p121 = scmp.ne.s32.totalorder %s116, %s118
      %p122 = scmp.eq.s32.totalorder %s19, 0
      %p123 = por %p121, %p122
      %p124 = scmp.ne.s32.totalorder %s116, %s118
      %p125 = scmp.eq.s32.totalorder %s24, 1
      %p126 = por %p124, %p125
      %p127 = scmp.ne.s32.totalorder %s118, %s119
      %p128 = scmp.eq.s32.totalorder %s24, 0
      %p129 = por %p127, %p128
      %p130 = scmp.ne.s32.totalorder %s118, %s119
      %p131 = scmp.eq.s32.totalorder %s25, 1
      %p132 = por %p130, %p131
      %p134 = scmp.ne.s32.totalorder %s119, %s133
      %p135 = scmp.eq.s32.totalorder %s25, 0
      %p136 = por %p134, %p135
      %s137 = ssub.s32 %s19, %s26
      %p138 = scmp.eq.s32.totalorder %s137, 0
      %s140 = sadd.s32 %s139, 1
      %s141 = scalar_select %p138, %s139, %s140
      %p144 = pneg %p138
      %p145 = scmp.eq.s32.totalorder %s19, 1
      %p146 = por %p144, %p145
      %p147 = scmp.ne.s32.totalorder %s139, %s142
      %p148 = scmp.eq.s32.totalorder %s19, 0
      %p149 = por %p147, %p148
      %p150 = scmp.ne.s32.totalorder %s139, %s142
      %p151 = scmp.eq.s32.totalorder %s24, 1
      %p152 = por %p150, %p151
      %p153 = scmp.ne.s32.totalorder %s142, %s143
      %p154 = scmp.eq.s32.totalorder %s24, 0
      %p155 = por %p153, %p154
      %p156 = scmp.ne.s32.totalorder %s142, %s143
      %p157 = scmp.eq.s32.totalorder %s25, 1
      %p158 = por %p156, %p157
      %p160 = scmp.ne.s32.totalorder %s143, %s159
      %p161 = scmp.eq.s32.totalorder %s25, 0
      %p162 = por %p160, %p161
      %p163 = scmp.le.s32.totalorder 1, %s19
      %p164 = scmp.lt.s32.totalorder %s19, 3
      %p165 = pnand %p163, %p164
      %p166 = pneg %p165
      // Predicated region
      $region9: #{tpu_custom_call.1} parent=5 // pred_check
        _
      $region10: #{tpu_custom_call.1} parent=5 // pred_check_branch
        %168 = sbr.rel (%p165) target = $region12
      $region11: #{tpu_custom_call.1} parent=5 // pred_region
        %s169 = ssub.s32 %s19, 1
        // Predicated region
        $region13: #{tpu_custom_call.1} parent=11 // pred_check
          %p170 = pneg %p66
        $region14: #{tpu_custom_call.1} parent=11 // pred_check_branch
          %172 = sbr.rel (%p170) target = $region16
        $region15: #{tpu_custom_call.1} parent=11 // pred_region
          %s174 = ssub.s32 576, 576
          %175 = vsyncadd [#allocation9], %s174
          %s176 = sshll.u32 [#allocation8], 4
          %s177 = int_to_ptr.vmem [resolvable:$true] %s176
          %182 = dma.hbm_to_vmem [thread:$0]  %s1, 576, %s177, [#allocation9], 64, 64, 4
        $region16: #{tpu_custom_call.1} parent=11 // pred_fallthru
          _
        // Predicated region
        $region17: #{tpu_custom_call.1} parent=11 // pred_check
          %p183 = pneg %p87
        $region18: #{tpu_custom_call.1} parent=11 // pred_check_branch
          %185 = sbr.rel (%p183) target = $region20
        $region19: #{tpu_custom_call.1} parent=11 // pred_region
          %s187 = ssub.s32 16, 16
          %188 = vsyncadd [#allocation9], %s187
          %s190 = sshll.u32 [#allocation10], 4
          %s191 = int_to_ptr.vmem [resolvable:$true] %s190
          %193 = dma.hbm_to_vmem [thread:$0]  %s2, 16, %s191, [#allocation9]
        $region20: #{tpu_custom_call.1} parent=11 // pred_fallthru
          _
        // Predicated region
        $region21: #{tpu_custom_call.1} parent=11 // pred_check
          %p194 = pneg %p108
        $region22: #{tpu_custom_call.1} parent=11 // pred_check_branch
          %196 = sbr.rel (%p194) target = $region24
        $region23: #{tpu_custom_call.1} parent=11 // pred_region
          %s198 = ssub.s32 1152, 1152
          %199 = vsyncadd [#allocation12], %s198
          %s200 = sshll.u32 [#allocation11], 4
          %s201 = int_to_ptr.vmem [resolvable:$true] %s200
          %206 = dma.hbm_to_vmem [thread:$0]  %s3, 1152, %s201, [#allocation12], 64, 64, 4
        $region24: #{tpu_custom_call.1} parent=11 // pred_fallthru
          _
        // Predicated region
        $region25: #{tpu_custom_call.1} parent=11 // pred_check
          %p207 = pneg %p129
        $region26: #{tpu_custom_call.1} parent=11 // pred_check_branch
          %209 = sbr.rel (%p207) target = $region28
        $region27: #{tpu_custom_call.1} parent=11 // pred_region
          %s211 = ssub.s32 16, 16
          %212 = vsyncadd [#allocation12], %s211
          %s214 = sshll.u32 [#allocation13], 4
          %s215 = int_to_ptr.vmem [resolvable:$true] %s214
          %217 = dma.hbm_to_vmem [thread:$0]  %s4, 16, %s215, [#allocation12]
        $region28: #{tpu_custom_call.1} parent=11 // pred_fallthru
          _
      $region12: #{tpu_custom_call.1} parent=5 // pred_fallthru
        _
      %p218 = scmp.lt.s32.totalorder %s19, 2
      // Predicated region
      $region29: #{tpu_custom_call.1} parent=5 // pred_check
        %p219 = pneg %p218
      $region30: #{tpu_custom_call.1} parent=5 // pred_check_branch
        %221 = sbr.rel (%p219) target = $region32
      $region31: #{tpu_custom_call.1} parent=5 // pred_region
        // Predicated region
        $region33: #{tpu_custom_call.1} parent=31 // pred_check
          %p222 = pneg %p39
        $region34: #{tpu_custom_call.1} parent=31 // pred_check_branch
          %224 = sbr.rel (%p222) target = $region36
        $region35: #{tpu_custom_call.1} parent=31 // pred_region
          %s225 = sand.u32 %s29, 1
          %s226 = scalar_lea.sflag [#allocation6], %s225
          %s227 = sand.u32 %s29, 1
          %s228 = smul.addr %s227, 288
          %s229 = scalar_lea.vmem [#allocation5], %s228
          %s231 = ssub.s32 4608, 4608
          %232 = vsyncadd %s226, %s231
          %s233 = smul.addr %s19, 72
          %s234 = smul.addr %s233, 64
          %s235 = scalar_lea.hbm %s0, %s234
          %s236 = sshll.u32 %s229, 4
          %s237 = int_to_ptr.vmem [resolvable:$true] %s236
          %242 = dma.hbm_to_vmem [thread:$0]  %s235, 4608, %s237, %s226, 64, 64, 4
        $region36: #{tpu_custom_call.1} parent=31 // pred_fallthru
          _
      $region32: #{tpu_custom_call.1} parent=5 // pred_fallthru
        _
      %p243 = scmp.le.s32.totalorder 1, %s19
      %p244 = scmp.lt.s32.totalorder %s19, 3
      %p245 = pnand %p243, %p244
      %p246 = pneg %p245
      // Predicated region
      $region37: #{tpu_custom_call.1} parent=5 // pred_check
        _
      $region38: #{tpu_custom_call.1} parent=5 // pred_check_branch
        %248 = sbr.rel (%p245) target = $region40
      $region39: #{tpu_custom_call.1} parent=5 // pred_region
        %s249 = ssub.s32 %s19, 1
        %s250 = sand.u32 %s32, 1
        %s251 = scalar_lea.sflag [#allocation6], %s250
        %s252 = sand.u32 %s32, 1
        %s253 = smul.addr %s252, 288
        %s254 = scalar_lea.vmem [#allocation5], %s253
        // Predicated region
        $region41: #{tpu_custom_call.1} parent=39 // pred_check
          %p255 = pneg %p45
        $region42: #{tpu_custom_call.1} parent=39 // pred_check_branch
          %257 = sbr.rel (%p255) target = $region44
        $region43: #{tpu_custom_call.1} parent=39 // pred_region
          %258 = dma.done %s251, 4608
        $region44: #{tpu_custom_call.1} parent=39 // pred_fallthru
          _
        // Predicated region
        $region45: #{tpu_custom_call.1} parent=39 // pred_check
          %p259 = pneg %p66
        $region46: #{tpu_custom_call.1} parent=39 // pred_check_branch
          %261 = sbr.rel (%p259) target = $region48
        $region47: #{tpu_custom_call.1} parent=39 // pred_region
          %262 = dma.done [#allocation9], 576
        $region48: #{tpu_custom_call.1} parent=39 // pred_fallthru
          _
        // Predicated region
        $region49: #{tpu_custom_call.1} parent=39 // pred_check
          %p263 = pneg %p87
        $region50: #{tpu_custom_call.1} parent=39 // pred_check_branch
          %265 = sbr.rel (%p263) target = $region52
        $region51: #{tpu_custom_call.1} parent=39 // pred_region
          %266 = dma.done [#allocation9], 16
        $region52: #{tpu_custom_call.1} parent=39 // pred_fallthru
          _
        // Predicated region
        $region53: #{tpu_custom_call.1} parent=39 // pred_check
          %p267 = pneg %p108
        $region54: #{tpu_custom_call.1} parent=39 // pred_check_branch
          %269 = sbr.rel (%p267) target = $region56
        $region55: #{tpu_custom_call.1} parent=39 // pred_region
          %270 = dma.done [#allocation12], 1152
        $region56: #{tpu_custom_call.1} parent=39 // pred_fallthru
          _
        // Predicated region
        $region57: #{tpu_custom_call.1} parent=39 // pred_check
          %p271 = pneg %p129
        $region58: #{tpu_custom_call.1} parent=39 // pred_check_branch
          %273 = sbr.rel (%p271) target = $region60
        $region59: #{tpu_custom_call.1} parent=39 // pred_region
          %274 = dma.done [#allocation12], 16
        $region60: #{tpu_custom_call.1} parent=39 // pred_fallthru
          _
        %s275 = sand.u32 %s32, 1
        %s276 = scalar_lea.sflag [#allocation6], %s275
        %s277 = sand.u32 %s32, 1
        %s278 = smul.addr %s277, 288
        %s279 = scalar_lea.vmem [#allocation5], %s278
        %p280 = pneg %p45
        %p281 = pneg %p42
        %p282 = pneg %p66
        %p283 = pneg %p63
        %p284 = pneg %p87
        %p285 = pneg %p84
        %p286 = pneg %p108
        %p287 = pneg %p105
        %p288 = pneg %p129
        %p289 = pneg %p126
        %p290 = pneg %p155
        %p291 = pneg %p152
        %s292 = sand.u32 %s142, 1
        %s293 = scalar_lea.sflag [#allocation7], %s292
        %s294 = sand.u32 %s142, 1
        %s295 = smul.addr %s294, 16
        %s296 = scalar_lea.vmem [#allocation14], %s295
        %p298 = scmp.eq.s32.totalorder %s24, 0
        // Predicated region
        $region61: #{tpu_custom_call.1} parent=39 // pred_check
          %p299 = pneg %p298
        $region62: #{tpu_custom_call.1} parent=39 // pred_check_branch
          %301 = sbr.rel (%p299) target = $region64
        $region63: #{tpu_custom_call.1} parent=39 // pred_region
          %vm302 = vcmask 125952
          %303 = vst.msk [vmem:[#allocation3] sm:$0xf] %vm302, 0
          %vm304 = vcmask 122880
          %305 = vst.msk [vmem:[#allocation3 + $0x4] sm:$0x1] %vm304, 0
          %306 = vst.msk [vmem:[#allocation3 + $0x8] sm:$0xf] %vm302, 0
          %307 = vst.msk [vmem:[#allocation3 + $0xc] sm:$0x1] %vm304, 0
          %308 = vst.msk [vmem:[#allocation3 + $0x10] sm:$0xf] %vm302, 0
          %309 = vst.msk [vmem:[#allocation3 + $0x14] sm:$0x1] %vm304, 0
          %310 = vst.msk [vmem:[#allocation3 + $0x18] sm:$0xf] %vm302, 0
          %311 = vst.msk [vmem:[#allocation3 + $0x1c] sm:$0x1] %vm304, 0
          %312 = vst.msk [vmem:[#allocation3 + $0x20] sm:$0xf] %vm302, 0
          %313 = vst.msk [vmem:[#allocation3 + $0x24] sm:$0x1] %vm304, 0
          %314 = vst.msk [vmem:[#allocation3 + $0x28] sm:$0xf] %vm302, 0
          %315 = vst.msk [vmem:[#allocation3 + $0x2c] sm:$0x1] %vm304, 0
          %316 = vst.msk [vmem:[#allocation3 + $0x30] sm:$0xf] %vm302, 0
          %317 = vst.msk [vmem:[#allocation3 + $0x34] sm:$0x1] %vm304, 0
          %318 = vst.msk [vmem:[#allocation3 + $0x38] sm:$0xf] %vm302, 0
          %319 = vst.msk [vmem:[#allocation3 + $0x3c] sm:$0x1] %vm304, 0
          %320 = vst.msk [vmem:[#allocation3 + $0x40] sm:$0xf] %vm302, 0
          %321 = vst.msk [vmem:[#allocation3 + $0x44] sm:$0x1] %vm304, 0
          %322 = vst.msk [vmem:[#allocation3 + $0x48] sm:$0xf] %vm302, 0
          %323 = vst.msk [vmem:[#allocation3 + $0x4c] sm:$0x1] %vm304, 0
        $region64: #{tpu_custom_call.1} parent=39 // pred_fallthru
          _
        %v324 = vld [vmem:[%s254] sm:$0xf]
        %v325 = vld [vmem:[%s254 + $0x8] sm:$0xf]
        %v326 = vld [vmem:[%s254 + $0x10] sm:$0xf]
        %v327 = vld [vmem:[%s254 + $0x18] sm:$0xf]
        %v328 = vld [vmem:[%s254 + $0x20] sm:$0xf]
        %v329 = vld [vmem:[%s254 + $0x28] sm:$0xf]
        %v330 = vld [vmem:[%s254 + $0x30] sm:$0xf]
        %v331 = vld [vmem:[%s254 + $0x38] sm:$0xf]
        %v340 = vunpack.c.l.b16 %v324
        %v341 = vunpack.c.l.b16 %v325
        %v342 = vunpack.c.l.b16 %v326
        %v343 = vunpack.c.l.b16 %v327
        %v344 = vunpack.c.l.b16 %v328
        %v345 = vunpack.c.l.b16 %v329
        %v346 = vunpack.c.l.b16 %v330
        %v347 = vunpack.c.l.b16 %v331
        %v348 = vpack.c.b16 %v341, %v340
        %v349 = vpack.c.b16 %v343, %v342
        %v350 = vpack.c.b16 %v345, %v344
        %v351 = vpack.c.b16 %v347, %v346
        %vm356 = vcmask 64512
        %357 = vst.msk [vmem:[#allocation2] sm:$0xff] %vm356, %v348
        %358 = vst.msk [vmem:[#allocation2 + $0x8] sm:$0xff] %vm356, %v349
        %359 = vst.msk [vmem:[#allocation2 + $0x10] sm:$0xff] %vm356, %v350
        %360 = vst.msk [vmem:[#allocation2 + $0x18] sm:$0xff] %vm356, %v351
        %s361 = scalar_lea.vmem %s254, 72 [#allocation5]
        %v362 = vld [vmem:[%s361] sm:$0xf]
        %v363 = vld [vmem:[%s361 + $0x8] sm:$0xf]
        %v364 = vld [vmem:[%s361 + $0x10] sm:$0xf]
        %v365 = vld [vmem:[%s361 + $0x18] sm:$0xf]
        %v366 = vld [vmem:[%s361 + $0x20] sm:$0xf]
        %v367 = vld [vmem:[%s361 + $0x28] sm:$0xf]
        %v368 = vld [vmem:[%s361 + $0x30] sm:$0xf]
        %v369 = vld [vmem:[%s361 + $0x38] sm:$0xf]
        %v378 = vunpack.c.l.b16 %v362
        %v379 = vunpack.c.l.b16 %v363
        %v380 = vunpack.c.l.b16 %v364
        %v381 = vunpack.c.l.b16 %v365
        %v382 = vunpack.c.l.b16 %v366
        %v383 = vunpack.c.l.b16 %v367
        %v384 = vunpack.c.l.b16 %v368
        %v385 = vunpack.c.l.b16 %v369
        %v386 = vpack.c.b16 %v379, %v378
        %v387 = vpack.c.b16 %v381, %v380
        %v388 = vpack.c.b16 %v383, %v382
        %v389 = vpack.c.b16 %v385, %v384
        %390 = vrot.lane.b32.xlu0 %v386, 8
        %v391 = vpop.permute.xlu0 %390
        %392 = vrot.lane.b32.xlu0 %v387, 8
        %v393 = vpop.permute.xlu0 %392
        %394 = vrot.lane.b32.xlu0 %v388, 8
        %v395 = vpop.permute.xlu0 %394
        %396 = vrot.lane.b32.xlu0 %v389, 8
        %v397 = vpop.permute.xlu0 %396
        %vm402 = vcmask 130112
        %403 = vst.msk [vmem:[#allocation2] sm:$0xff] %vm402, %v391
        %404 = vst.msk [vmem:[#allocation2 + $0x8] sm:$0xff] %vm402, %v393
        %405 = vst.msk [vmem:[#allocation2 + $0x10] sm:$0xff] %vm402, %v395
        %406 = vst.msk [vmem:[#allocation2 + $0x18] sm:$0xff] %vm402, %v397
        %v407 = vld [vmem:[%s254] sm:$0xf]
        %v408 = vld [vmem:[%s254 + $0x4] sm:$0x1]
        %v409 = vld [vmem:[%s254 + $0x8] sm:$0xf]
        %v410 = vld [vmem:[%s254 + $0xc] sm:$0x1]
        %v411 = vld [vmem:[%s254 + $0x10] sm:$0xf]
        %v412 = vld [vmem:[%s254 + $0x14] sm:$0x1]
        %v413 = vld [vmem:[%s254 + $0x18] sm:$0xf]
        %v414 = vld [vmem:[%s254 + $0x1c] sm:$0x1]
        %v415 = vld [vmem:[%s254 + $0x20] sm:$0xf]
        %v416 = vld [vmem:[%s254 + $0x24] sm:$0x1]
        %v417 = vld [vmem:[%s254 + $0x28] sm:$0xf]
        %v418 = vld [vmem:[%s254 + $0x2c] sm:$0x1]
        %v419 = vld [vmem:[%s254 + $0x30] sm:$0xf]
        %v420 = vld [vmem:[%s254 + $0x34] sm:$0x1]
        %v421 = vld [vmem:[%s254 + $0x38] sm:$0xf]
        %v422 = vld [vmem:[%s254 + $0x3c] sm:$0x1]
        %vm423 = vsmask.f32 3328
        %vm424 = vsmask.f32 7440
        %vm425 = vmor %vm423, %vm424
        %v427 = vshrl.u32 %v407, 16
        %v429 = vrot.slane %v427, 4
        %v430 = vshll.u32 %v407, 16
        %v432 = vrot.slane %v430, 5
        %v433 = vor.u32 %v429, %v432
        %v434 = vrot.slane %v433, 4
        %v436 = vshll.u32 %v408, 16
        %v438 = vrot.slane %v436, 5
        %v439 = vsel %vm425, %v434, %v438
        %v441 = vshrl.u32 %v409, 16
        %v443 = vrot.slane %v441, 4
        %v444 = vshll.u32 %v409, 16
        %v446 = vrot.slane %v444, 5
        %v447 = vor.u32 %v443, %v446
        %v448 = vrot.slane %v447, 4
        %v450 = vshll.u32 %v410, 16
        %v452 = vrot.slane %v450, 5
        %v453 = vsel %vm425, %v448, %v452
        %v455 = vshrl.u32 %v411, 16
        %v457 = vrot.slane %v455, 4
        %v458 = vshll.u32 %v411, 16
        %v460 = vrot.slane %v458, 5
        %v461 = vor.u32 %v457, %v460
        %v462 = vrot.slane %v461, 4
        %v464 = vshll.u32 %v412, 16
        %v466 = vrot.slane %v464, 5
        %v467 = vsel %vm425, %v462, %v466
        %v469 = vshrl.u32 %v413, 16
        %v471 = vrot.slane %v469, 4
        %v472 = vshll.u32 %v413, 16
        %v474 = vrot.slane %v472, 5
        %v475 = vor.u32 %v471, %v474
        %v476 = vrot.slane %v475, 4
        %v478 = vshll.u32 %v414, 16
        %v480 = vrot.slane %v478, 5
        %v481 = vsel %vm425, %v476, %v480
        %v483 = vshrl.u32 %v415, 16
        %v485 = vrot.slane %v483, 4
        %v486 = vshll.u32 %v415, 16
        %v488 = vrot.slane %v486, 5
        %v489 = vor.u32 %v485, %v488
        %v490 = vrot.slane %v489, 4
        %v492 = vshll.u32 %v416, 16
        %v494 = vrot.slane %v492, 5
        %v495 = vsel %vm425, %v490, %v494
        %v497 = vshrl.u32 %v417, 16
        %v499 = vrot.slane %v497, 4
        %v500 = vshll.u32 %v417, 16
        %v502 = vrot.slane %v500, 5
        %v503 = vor.u32 %v499, %v502
        %v504 = vrot.slane %v503, 4
        %v506 = vshll.u32 %v418, 16
        %v508 = vrot.slane %v506, 5
        %v509 = vsel %vm425, %v504, %v508
        %v511 = vshrl.u32 %v419, 16
        %v513 = vrot.slane %v511, 4
        %v514 = vshll.u32 %v419, 16
        %v516 = vrot.slane %v514, 5
        %v517 = vor.u32 %v513, %v516
        %v518 = vrot.slane %v517, 4
        %v520 = vshll.u32 %v420, 16
        %v522 = vrot.slane %v520, 5
        %v523 = vsel %vm425, %v518, %v522
        %v525 = vshrl.u32 %v421, 16
        %v527 = vrot.slane %v525, 4
        %v528 = vshll.u32 %v421, 16
        %v530 = vrot.slane %v528, 5
        %v531 = vor.u32 %v527, %v530
        %v532 = vrot.slane %v531, 4
        %v534 = vshll.u32 %v422, 16
        %v536 = vrot.slane %v534, 5
        %v537 = vsel %vm425, %v532, %v536
        %v538 = vunpack.c.l.b16 %v439
        %v539 = vunpack.c.l.b16 %v453
        %v540 = vunpack.c.l.b16 %v467
        %v541 = vunpack.c.l.b16 %v481
        %v542 = vunpack.c.l.b16 %v495
        %v543 = vunpack.c.l.b16 %v509
        %v544 = vunpack.c.l.b16 %v523
        %v545 = vunpack.c.l.b16 %v537
        %v546 = vpack.c.b16 %v539, %v538
        %v547 = vpack.c.b16 %v541, %v540
        %v548 = vpack.c.b16 %v543, %v542
        %v549 = vpack.c.b16 %v545, %v544
        %550 = vrot.lane.b32.xlu0 %v546, 16
        %v551 = vpop.permute.xlu0 %550
        %552 = vrot.lane.b32.xlu0 %v547, 16
        %v553 = vpop.permute.xlu0 %552
        %554 = vrot.lane.b32.xlu0 %v548, 16
        %v555 = vpop.permute.xlu0 %554
        %556 = vrot.lane.b32.xlu0 %v549, 16
        %v557 = vpop.permute.xlu0 %556
        %vm562 = vcmask 195712
        %563 = vst.msk [vmem:[#allocation2] sm:$0xff] %vm562, %v551
        %564 = vst.msk [vmem:[#allocation2 + $0x8] sm:$0xff] %vm562, %v553
        %565 = vst.msk [vmem:[#allocation2 + $0x10] sm:$0xff] %vm562, %v555
        %566 = vst.msk [vmem:[#allocation2 + $0x18] sm:$0xff] %vm562, %v557
        %s567 = scalar_lea.vmem %s254, 144 [#allocation5]
        %v568 = vld [vmem:[%s567] sm:$0xf]
        %v569 = vld [vmem:[%s567 + $0x8] sm:$0xf]
        %v570 = vld [vmem:[%s567 + $0x10] sm:$0xf]
        %v571 = vld [vmem:[%s567 + $0x18] sm:$0xf]
        %v572 = vld [vmem:[%s567 + $0x20] sm:$0xf]
        %v573 = vld [vmem:[%s567 + $0x28] sm:$0xf]
        %v574 = vld [vmem:[%s567 + $0x30] sm:$0xf]
        %v575 = vld [vmem:[%s567 + $0x38] sm:$0xf]
        %v584 = vunpack.c.l.b16 %v568
        %v585 = vunpack.c.l.b16 %v569
        %v586 = vunpack.c.l.b16 %v570
        %v587 = vunpack.c.l.b16 %v571
        %v588 = vunpack.c.l.b16 %v572
        %v589 = vunpack.c.l.b16 %v573
        %v590 = vunpack.c.l.b16 %v574
        %v591 = vunpack.c.l.b16 %v575
        %v592 = vpack.c.b16 %v585, %v584
        %v593 = vpack.c.b16 %v587, %v586
        %v594 = vpack.c.b16 %v589, %v588
        %v595 = vpack.c.b16 %v591, %v590
        %596 = vrot.lane.b32.xlu0 %v592, 24
        %v597 = vpop.permute.xlu0 %596
        %598 = vrot.lane.b32.xlu0 %v593, 24
        %v599 = vpop.permute.xlu0 %598
        %600 = vrot.lane.b32.xlu0 %v594, 24
        %v601 = vpop.permute.xlu0 %600
        %602 = vrot.lane.b32.xlu0 %v595, 24
        %v603 = vpop.permute.xlu0 %602
        %vm608 = vcmask 261312
        %609 = vst.msk [vmem:[#allocation2] sm:$0xff] %vm608, %v597
        %610 = vst.msk [vmem:[#allocation2 + $0x8] sm:$0xff] %vm608, %v599
        %611 = vst.msk [vmem:[#allocation2 + $0x10] sm:$0xff] %vm608, %v601
        %612 = vst.msk [vmem:[#allocation2 + $0x18] sm:$0xff] %vm608, %v603
        %s613 = scalar_lea.vmem %s254, 216 [#allocation5]
        %v614 = vld [vmem:[%s613] sm:$0xf]
        %v615 = vld [vmem:[%s613 + $0x8] sm:$0xf]
        %v616 = vld [vmem:[%s613 + $0x10] sm:$0xf]
        %v617 = vld [vmem:[%s613 + $0x18] sm:$0xf]
        %v618 = vld [vmem:[%s613 + $0x20] sm:$0xf]
        %v619 = vld [vmem:[%s613 + $0x28] sm:$0xf]
        %v620 = vld [vmem:[%s613 + $0x30] sm:$0xf]
        %v621 = vld [vmem:[%s613 + $0x38] sm:$0xf]
        %v630 = vunpack.c.l.b16 %v614
        %v631 = vunpack.c.l.b16 %v615
        %v632 = vunpack.c.l.b16 %v616
        %v633 = vunpack.c.l.b16 %v617
        %v634 = vunpack.c.l.b16 %v618
        %v635 = vunpack.c.l.b16 %v619
        %v636 = vunpack.c.l.b16 %v620
        %v637 = vunpack.c.l.b16 %v621
        %v638 = vpack.c.b16 %v631, %v630
        %v639 = vpack.c.b16 %v633, %v632
        %v640 = vpack.c.b16 %v635, %v634
        %v641 = vpack.c.b16 %v637, %v636
        %642 = vrot.lane.b32.xlu0 %v638, 32
        %v643 = vpop.permute.xlu0 %642
        %644 = vrot.lane.b32.xlu0 %v639, 32
        %v645 = vpop.permute.xlu0 %644
        %646 = vrot.lane.b32.xlu0 %v640, 32
        %v647 = vpop.permute.xlu0 %646
        %648 = vrot.lane.b32.xlu0 %v641, 32
        %v649 = vpop.permute.xlu0 %648
        %vm654 = vcmask 326912
        %655 = vst.msk [vmem:[#allocation2] sm:$0xff] %vm654, %v643
        %656 = vst.msk [vmem:[#allocation2 + $0x8] sm:$0xff] %vm654, %v645
        %657 = vst.msk [vmem:[#allocation2 + $0x10] sm:$0xff] %vm654, %v647
        %658 = vst.msk [vmem:[#allocation2 + $0x18] sm:$0xff] %vm654, %v649
        %v659 = vld [vmem:[%s567] sm:$0xf]
        %v660 = vld [vmem:[%s567 + $0x4] sm:$0x1]
        %v661 = vld [vmem:[%s567 + $0x8] sm:$0xf]
        %v662 = vld [vmem:[%s567 + $0xc] sm:$0x1]
        %v663 = vld [vmem:[%s567 + $0x10] sm:$0xf]
        %v664 = vld [vmem:[%s567 + $0x14] sm:$0x1]
        %v665 = vld [vmem:[%s567 + $0x18] sm:$0xf]
        %v666 = vld [vmem:[%s567 + $0x1c] sm:$0x1]
        %v667 = vld [vmem:[%s567 + $0x20] sm:$0xf]
        %v668 = vld [vmem:[%s567 + $0x24] sm:$0x1]
        %v669 = vld [vmem:[%s567 + $0x28] sm:$0xf]
        %v670 = vld [vmem:[%s567 + $0x2c] sm:$0x1]
        %v671 = vld [vmem:[%s567 + $0x30] sm:$0xf]
        %v672 = vld [vmem:[%s567 + $0x34] sm:$0x1]
        %v673 = vld [vmem:[%s567 + $0x38] sm:$0xf]
        %v674 = vld [vmem:[%s567 + $0x3c] sm:$0x1]
        %v676 = vshrl.u32 %v659, 16
        %v678 = vrot.slane %v676, 4
        %v679 = vshll.u32 %v659, 16
        %v681 = vrot.slane %v679, 5
        %v682 = vor.u32 %v678, %v681
        %v683 = vrot.slane %v682, 4
        %v685 = vshll.u32 %v660, 16
        %v687 = vrot.slane %v685, 5
        %v688 = vsel %vm425, %v683, %v687
        %v690 = vshrl.u32 %v661, 16
        %v692 = vrot.slane %v690, 4
        %v693 = vshll.u32 %v661, 16
        %v695 = vrot.slane %v693, 5
        %v696 = vor.u32 %v692, %v695
        %v697 = vrot.slane %v696, 4
        %v699 = vshll.u32 %v662, 16
        %v701 = vrot.slane %v699, 5
        %v702 = vsel %vm425, %v697, %v701
        %v704 = vshrl.u32 %v663, 16
        %v706 = vrot.slane %v704, 4
        %v707 = vshll.u32 %v663, 16
        %v709 = vrot.slane %v707, 5
        %v710 = vor.u32 %v706, %v709
        %v711 = vrot.slane %v710, 4
        %v713 = vshll.u32 %v664, 16
        %v715 = vrot.slane %v713, 5
        %v716 = vsel %vm425, %v711, %v715
        %v718 = vshrl.u32 %v665, 16
        %v720 = vrot.slane %v718, 4
        %v721 = vshll.u32 %v665, 16
        %v723 = vrot.slane %v721, 5
        %v724 = vor.u32 %v720, %v723
        %v725 = vrot.slane %v724, 4
        %v727 = vshll.u32 %v666, 16
        %v729 = vrot.slane %v727, 5
        %v730 = vsel %vm425, %v725, %v729
        %v732 = vshrl.u32 %v667, 16
        %v734 = vrot.slane %v732, 4
        %v735 = vshll.u32 %v667, 16
        %v737 = vrot.slane %v735, 5
        %v738 = vor.u32 %v734, %v737
        %v739 = vrot.slane %v738, 4
        %v741 = vshll.u32 %v668, 16
        %v743 = vrot.slane %v741, 5
        %v744 = vsel %vm425, %v739, %v743
        %v746 = vshrl.u32 %v669, 16
        %v748 = vrot.slane %v746, 4
        %v749 = vshll.u32 %v669, 16
        %v751 = vrot.slane %v749, 5
        %v752 = vor.u32 %v748, %v751
        %v753 = vrot.slane %v752, 4
        %v755 = vshll.u32 %v670, 16
        %v757 = vrot.slane %v755, 5
        %v758 = vsel %vm425, %v753, %v757
        %v760 = vshrl.u32 %v671, 16
        %v762 = vrot.slane %v760, 4
        %v763 = vshll.u32 %v671, 16
        %v765 = vrot.slane %v763, 5
        %v766 = vor.u32 %v762, %v765
        %v767 = vrot.slane %v766, 4
        %v769 = vshll.u32 %v672, 16
        %v771 = vrot.slane %v769, 5
        %v772 = vsel %vm425, %v767, %v771
        %v774 = vshrl.u32 %v673, 16
        %v776 = vrot.slane %v774, 4
        %v777 = vshll.u32 %v673, 16
        %v779 = vrot.slane %v777, 5
        %v780 = vor.u32 %v776, %v779
        %v781 = vrot.slane %v780, 4
        %v783 = vshll.u32 %v674, 16
        %v785 = vrot.slane %v783, 5
        %v786 = vsel %vm425, %v781, %v785
        %v787 = vunpack.c.l.b16 %v688
        %v788 = vunpack.c.l.b16 %v702
        %v789 = vunpack.c.l.b16 %v716
        %v790 = vunpack.c.l.b16 %v730
        %v791 = vunpack.c.l.b16 %v744
        %v792 = vunpack.c.l.b16 %v758
        %v793 = vunpack.c.l.b16 %v772
        %v794 = vunpack.c.l.b16 %v786
        %v795 = vpack.c.b16 %v788, %v787
        %v796 = vpack.c.b16 %v790, %v789
        %v797 = vpack.c.b16 %v792, %v791
        %v798 = vpack.c.b16 %v794, %v793
        %799 = vrot.lane.b32.xlu0 %v795, 40
        %v800 = vpop.permute.xlu0 %799
        %801 = vrot.lane.b32.xlu0 %v796, 40
        %v802 = vpop.permute.xlu0 %801
        %803 = vrot.lane.b32.xlu0 %v797, 40
        %v804 = vpop.permute.xlu0 %803
        %805 = vrot.lane.b32.xlu0 %v798, 40
        %v806 = vpop.permute.xlu0 %805
        %vm811 = vcmask 392512
        %812 = vst.msk [vmem:[#allocation2] sm:$0xff] %vm811, %v800
        %813 = vst.msk [vmem:[#allocation2 + $0x8] sm:$0xff] %vm811, %v802
        %814 = vst.msk [vmem:[#allocation2 + $0x10] sm:$0xff] %vm811, %v804
        %815 = vst.msk [vmem:[#allocation2 + $0x18] sm:$0xff] %vm811, %v806
        %s816 = scalar_lea.vmem %s254, 8 [#allocation5]
        %v817 = vld [vmem:[%s816] sm:$0xf]
        %v818 = vld [vmem:[%s816 + $0x8] sm:$0xf]
        %v819 = vld [vmem:[%s816 + $0x10] sm:$0xf]
        %v820 = vld [vmem:[%s816 + $0x18] sm:$0xf]
        %v821 = vld [vmem:[%s816 + $0x20] sm:$0xf]
        %v822 = vld [vmem:[%s816 + $0x28] sm:$0xf]
        %v823 = vld [vmem:[%s816 + $0x30] sm:$0xf]
        %v824 = vld [vmem:[%s816 + $0x38] sm:$0xf]
        %v833 = vunpack.c.l.b16 %v817
        %v834 = vunpack.c.l.b16 %v818
        %v835 = vunpack.c.l.b16 %v819
        %v836 = vunpack.c.l.b16 %v820
        %v837 = vunpack.c.l.b16 %v821
        %v838 = vunpack.c.l.b16 %v822
        %v839 = vunpack.c.l.b16 %v823
        %v840 = vunpack.c.l.b16 %v824
        %v841 = vpack.c.b16 %v834, %v833
        %v842 = vpack.c.b16 %v836, %v835
        %v843 = vpack.c.b16 %v838, %v837
        %v844 = vpack.c.b16 %v840, %v839
        %845 = vrot.lane.b32.xlu0 %v841, 48
        %v846 = vpop.permute.xlu0 %845
        %847 = vrot.lane.b32.xlu0 %v842, 48
        %v848 = vpop.permute.xlu0 %847
        %849 = vrot.lane.b32.xlu0 %v843, 48
        %v850 = vpop.permute.xlu0 %849
        %851 = vrot.lane.b32.xlu0 %v844, 48
        %v852 = vpop.permute.xlu0 %851
        %vm857 = vcmask 458112
        %858 = vst.msk [vmem:[#allocation2] sm:$0xff] %vm857, %v846
        %859 = vst.msk [vmem:[#allocation2 + $0x8] sm:$0xff] %vm857, %v848
        %860 = vst.msk [vmem:[#allocation2 + $0x10] sm:$0xff] %vm857, %v850
        %861 = vst.msk [vmem:[#allocation2 + $0x18] sm:$0xff] %vm857, %v852
        %s862 = scalar_lea.vmem %s254, 80 [#allocation5]
        %v863 = vld [vmem:[%s862] sm:$0xf]
        %v864 = vld [vmem:[%s862 + $0x8] sm:$0xf]
        %v865 = vld [vmem:[%s862 + $0x10] sm:$0xf]
        %v866 = vld [vmem:[%s862 + $0x18] sm:$0xf]
        %v867 = vld [vmem:[%s862 + $0x20] sm:$0xf]
        %v868 = vld [vmem:[%s862 + $0x28] sm:$0xf]
        %v869 = vld [vmem:[%s862 + $0x30] sm:$0xf]
        %v870 = vld [vmem:[%s862 + $0x38] sm:$0xf]
        %v879 = vunpack.c.l.b16 %v863
        %v880 = vunpack.c.l.b16 %v864
        %v881 = vunpack.c.l.b16 %v865
        %v882 = vunpack.c.l.b16 %v866
        %v883 = vunpack.c.l.b16 %v867
        %v884 = vunpack.c.l.b16 %v868
        %v885 = vunpack.c.l.b16 %v869
        %v886 = vunpack.c.l.b16 %v870
        %v887 = vpack.c.b16 %v880, %v879
        %v888 = vpack.c.b16 %v882, %v881
        %v889 = vpack.c.b16 %v884, %v883
        %v890 = vpack.c.b16 %v886, %v885
        %891 = vrot.lane.b32.xlu0 %v887, 56
        %v892 = vpop.permute.xlu0 %891
        %893 = vrot.lane.b32.xlu0 %v888, 56
        %v894 = vpop.permute.xlu0 %893
        %895 = vrot.lane.b32.xlu0 %v889, 56
        %v896 = vpop.permute.xlu0 %895
        %897 = vrot.lane.b32.xlu0 %v890, 56
        %v898 = vpop.permute.xlu0 %897
        %vm903 = vcmask 523712
        %904 = vst.msk [vmem:[#allocation2] sm:$0xff] %vm903, %v892
        %905 = vst.msk [vmem:[#allocation2 + $0x8] sm:$0xff] %vm903, %v894
        %906 = vst.msk [vmem:[#allocation2 + $0x10] sm:$0xff] %vm903, %v896
        %907 = vst.msk [vmem:[#allocation2 + $0x18] sm:$0xff] %vm903, %v898
        %v908 = vld [vmem:[%s816] sm:$0xf]
        %v909 = vld [vmem:[%s816 + $0x4] sm:$0x1]
        %v910 = vld [vmem:[%s816 + $0x8] sm:$0xf]
        %v911 = vld [vmem:[%s816 + $0xc] sm:$0x1]
        %v912 = vld [vmem:[%s816 + $0x10] sm:$0xf]
        %v913 = vld [vmem:[%s816 + $0x14] sm:$0x1]
        %v914 = vld [vmem:[%s816 + $0x18] sm:$0xf]
        %v915 = vld [vmem:[%s816 + $0x1c] sm:$0x1]
        %v916 = vld [vmem:[%s816 + $0x20] sm:$0xf]
        %v917 = vld [vmem:[%s816 + $0x24] sm:$0x1]
        %v918 = vld [vmem:[%s816 + $0x28] sm:$0xf]
        %v919 = vld [vmem:[%s816 + $0x2c] sm:$0x1]
        %v920 = vld [vmem:[%s816 + $0x30] sm:$0xf]
        %v921 = vld [vmem:[%s816 + $0x34] sm:$0x1]
        %v922 = vld [vmem:[%s816 + $0x38] sm:$0xf]
        %v923 = vld [vmem:[%s816 + $0x3c] sm:$0x1]
        %v925 = vshrl.u32 %v908, 16
        %v927 = vrot.slane %v925, 4
        %v928 = vshll.u32 %v908, 16
        %v930 = vrot.slane %v928, 5
        %v931 = vor.u32 %v927, %v930
        %v932 = vrot.slane %v931, 4
        %v934 = vshll.u32 %v909, 16
        %v936 = vrot.slane %v934, 5
        %v937 = vsel %vm425, %v932, %v936
        %v939 = vshrl.u32 %v910, 16
        %v941 = vrot.slane %v939, 4
        %v942 = vshll.u32 %v910, 16
        %v944 = vrot.slane %v942, 5
        %v945 = vor.u32 %v941, %v944
        %v946 = vrot.slane %v945, 4
        %v948 = vshll.u32 %v911, 16
        %v950 = vrot.slane %v948, 5
        %v951 = vsel %vm425, %v946, %v950
        %v953 = vshrl.u32 %v912, 16
        %v955 = vrot.slane %v953, 4
        %v956 = vshll.u32 %v912, 16
        %v958 = vrot.slane %v956, 5
        %v959 = vor.u32 %v955, %v958
        %v960 = vrot.slane %v959, 4
        %v962 = vshll.u32 %v913, 16
        %v964 = vrot.slane %v962, 5
        %v965 = vsel %vm425, %v960, %v964
        %v967 = vshrl.u32 %v914, 16
        %v969 = vrot.slane %v967, 4
        %v970 = vshll.u32 %v914, 16
        %v972 = vrot.slane %v970, 5
        %v973 = vor.u32 %v969, %v972
        %v974 = vrot.slane %v973, 4
        %v976 = vshll.u32 %v915, 16
        %v978 = vrot.slane %v976, 5
        %v979 = vsel %vm425, %v974, %v978
        %v981 = vshrl.u32 %v916, 16
        %v983 = vrot.slane %v981, 4
        %v984 = vshll.u32 %v916, 16
        %v986 = vrot.slane %v984, 5
        %v987 = vor.u32 %v983, %v986
        %v988 = vrot.slane %v987, 4
        %v990 = vshll.u32 %v917, 16
        %v992 = vrot.slane %v990, 5
        %v993 = vsel %vm425, %v988, %v992
        %v995 = vshrl.u32 %v918, 16
        %v997 = vrot.slane %v995, 4
        %v998 = vshll.u32 %v918, 16
        %v1000 = vrot.slane %v998, 5
        %v1001 = vor.u32 %v997, %v1000
        %v1002 = vrot.slane %v1001, 4
        %v1004 = vshll.u32 %v919, 16
        %v1006 = vrot.slane %v1004, 5
        %v1007 = vsel %vm425, %v1002, %v1006
        %v1009 = vshrl.u32 %v920, 16
        %v1011 = vrot.slane %v1009, 4
        %v1012 = vshll.u32 %v920, 16
        %v1014 = vrot.slane %v1012, 5
        %v1015 = vor.u32 %v1011, %v1014
        %v1016 = vrot.slane %v1015, 4
        %v1018 = vshll.u32 %v921, 16
        %v1020 = vrot.slane %v1018, 5
        %v1021 = vsel %vm425, %v1016, %v1020
        %v1023 = vshrl.u32 %v922, 16
        %v1025 = vrot.slane %v1023, 4
        %v1026 = vshll.u32 %v922, 16
        %v1028 = vrot.slane %v1026, 5
        %v1029 = vor.u32 %v1025, %v1028
        %v1030 = vrot.slane %v1029, 4
        %v1032 = vshll.u32 %v923, 16
        %v1034 = vrot.slane %v1032, 5
        %v1035 = vsel %vm425, %v1030, %v1034
        %v1036 = vunpack.c.l.b16 %v937
        %v1037 = vunpack.c.l.b16 %v951
        %v1038 = vunpack.c.l.b16 %v965
        %v1039 = vunpack.c.l.b16 %v979
        %v1040 = vunpack.c.l.b16 %v993
        %v1041 = vunpack.c.l.b16 %v1007
        %v1042 = vunpack.c.l.b16 %v1021
        %v1043 = vunpack.c.l.b16 %v1035
        %v1044 = vpack.c.b16 %v1037, %v1036
        %v1045 = vpack.c.b16 %v1039, %v1038
        %v1046 = vpack.c.b16 %v1041, %v1040
        %v1047 = vpack.c.b16 %v1043, %v1042
        %1048 = vrot.lane.b32.xlu0 %v1044, 64
        %v1049 = vpop.permute.xlu0 %1048
        %1050 = vrot.lane.b32.xlu0 %v1045, 64
        %v1051 = vpop.permute.xlu0 %1050
        %1052 = vrot.lane.b32.xlu0 %v1046, 64
        %v1053 = vpop.permute.xlu0 %1052
        %1054 = vrot.lane.b32.xlu0 %v1047, 64
        %v1055 = vpop.permute.xlu0 %1054
        %vm1060 = vcmask 589312
        %1061 = vst.msk [vmem:[#allocation2] sm:$0xff] %vm1060, %v1049
        %1062 = vst.msk [vmem:[#allocation2 + $0x8] sm:$0xff] %vm1060, %v1051
        %1063 = vst.msk [vmem:[#allocation2 + $0x10] sm:$0xff] %vm1060, %v1053
        %1064 = vst.msk [vmem:[#allocation2 + $0x18] sm:$0xff] %vm1060, %v1055
        %v1065 = vld [vmem:[#allocation2] sm:$0xff]
        %v1066 = vld [vmem:[#allocation2 + $0x8] sm:$0xff]
        %v1067 = vld [vmem:[#allocation2 + $0x10] sm:$0xff]
        %v1068 = vld [vmem:[#allocation2 + $0x18] sm:$0xff]
        %v1069 = vld [vmem:[#allocation8] sm:$0xf]
        %v1070 = vld [vmem:[#allocation8 + $0x4] sm:$0xf]
        %v1071 = vld [vmem:[#allocation8 + $0x8] sm:$0xf]
        %v1072 = vld [vmem:[#allocation8 + $0xc] sm:$0xf]
        %v1073 = vld [vmem:[#allocation8 + $0x10] sm:$0xf]
        %v1074 = vld [vmem:[#allocation8 + $0x14] sm:$0xf]
        %v1075 = vld [vmem:[#allocation8 + $0x18] sm:$0xf]
        %v1076 = vld [vmem:[#allocation8 + $0x1c] sm:$0xf]
        %v1077 = vld [vmem:[#allocation8 + $0x20] sm:$0xf]
        %v1078 = vld [vmem:[#allocation10] sm:$0x1]
        %v1080 = vlaneseq
        %v1081 = vshrl.u32 %v1080, 7
        %v1082 = vsub.s32 0, %v1081
        %v1083 = vrot.slane %v1078, %v1082
        %v1094 = vunpack.c.l.b16 %v1069
        %v1095 = vunpack.c.l.b16 %v1070
        %v1096 = vunpack.c.l.b16 %v1071
        %v1097 = vunpack.c.l.b16 %v1072
        %v1098 = vunpack.c.l.b16 %v1073
        %v1099 = vunpack.c.l.b16 %v1074
        %v1100 = vunpack.c.l.b16 %v1075
        %v1101 = vunpack.c.l.b16 %v1076
        %v1102 = vunpack.c.l.b16 %v1077
        %v1103 = vpack.c.b16 %v1095, %v1094
        %v1104 = vpack.c.b16 %v1097, %v1096
        %v1105 = vpack.c.b16 %v1099, %v1098
        %v1106 = vpack.c.b16 %v1101, %v1100
        %v1107 = vpack.c.b16 %v1102, %v1102
        %vm1112 = vcmask 588800
        %v1114 = vsel %vm1112, %v1065, 0
        %v1117 = vsel %vm1112, %v1066, 0
        %v1120 = vsel %vm1112, %v1067, 0
        %v1123 = vsel %vm1112, %v1068, 0
        %vm1125 = vcmask 1043456
        %v1127 = vsel %vm1125, %v1107, 0
        %1129 = vmatprep.subr.bf16.mxu0 0
        %1130 = vmatpush1.bf16.msra.mxu0 %v1103
        %1131 = vmatprep.subr.bf16.mxu0 0
        %1132 = vmatpush1.bf16.msra.mxu0 %v1104
        %1133 = vmatprep.subr.bf16.mxu0 0
        %1134 = vmatpush1.bf16.msra.mxu0 %v1105
        %1135 = vmatprep.subr.bf16.mxu0 0
        %1136 = vmatpush1.bf16.msra.mxu0 %v1106
        %1137 = vmatprep.subr.bf16.mxu0 0
        %1138 = vmatpush1.bf16.msra.mxu0 %v1127
        %1139 = vmatprep.subr.bf16.mxu0 0
        %1140 = vmatpush1.bf16.msra.mxu0 0
        %1141 = vmatprep.subr.bf16.mxu0 0
        %1142 = vmatpush1.bf16.msra.mxu0 0
        %1143 = vmatprep.subr.bf16.mxu0 0
        %1144 = vmatpush1.bf16.msra.mxu0 0
        %1145 = vmatprep.subr.bf16.mxu0 0
        %1146 = vmatpush1.bf16.msra.mxu0 0
        %1147 = vmatprep.subr.bf16.mxu0 0
        %1148 = vmatpush1.bf16.msra.mxu0 0
        %1149 = vmatprep.subr.bf16.mxu0 0
        %1150 = vmatpush1.bf16.msra.mxu0 0
        %1151 = vmatprep.subr.bf16.mxu0 0
        %1152 = vmatpush1.bf16.msra.mxu0 0
        %1153 = vmatprep.subr.bf16.mxu0 0
        %1154 = vmatpush1.bf16.msra.mxu0 0
        %1155 = vmatprep.subr.bf16.mxu0 0
        %1156 = vmatpush1.bf16.msra.mxu0 0
        %1157 = vmatprep.subr.bf16.mxu0 0
        %1158 = vmatpush1.bf16.msra.mxu0 0
        %1159 = vmatprep.subr.bf16.mxu0 0
        %1160 = vmatpush1.bf16.msra.mxu0 0
        %1161 = vmatprep.mubr.bf16.mxu0 0
        %1162 = vmatmul.mubr.bf16.gmra.mrb[0].mxu0 %v1114
        %v1163 = vpop.f32.mrb[0].mxu0
        %v1164 = vadd.f32 %v1083, %v1163
        %v1165 = vpop.f32.mrb[0].mxu0
        %v1166 = vpop.f32.mrb[0].mxu0
        %v1167 = vadd.f32 %v1083, %v1166
        %v1168 = vpop.f32.mrb[0].mxu0
        %1169 = vmatprep.mubr.bf16.mxu0 0
        %1170 = vmatmul.mubr.bf16.gmra.mrb[0].mxu0 %v1117
        %v1171 = vpop.f32.mrb[0].mxu0
        %v1172 = vadd.f32 %v1083, %v1171
        %v1173 = vpop.f32.mrb[0].mxu0
        %v1174 = vpop.f32.mrb[0].mxu0
        %v1175 = vadd.f32 %v1083, %v1174
        %v1176 = vpop.f32.mrb[0].mxu0
        %1177 = vmatprep.mubr.bf16.mxu0 0
        %1178 = vmatmul.mubr.bf16.gmra.mrb[0].mxu0 %v1120
        %v1179 = vpop.f32.mrb[0].mxu0
        %v1180 = vadd.f32 %v1083, %v1179
        %v1181 = vpop.f32.mrb[0].mxu0
        %v1182 = vpop.f32.mrb[0].mxu0
        %v1183 = vadd.f32 %v1083, %v1182
        %v1184 = vpop.f32.mrb[0].mxu0
        %1185 = vmatprep.mubr.bf16.mxu0 0
        %1186 = vmatmul.mubr.bf16.gmra.mrb[0].mxu0 %v1123
        %v1187 = vpop.f32.mrb[0].mxu0
        %v1188 = vadd.f32 %v1083, %v1187
        %v1189 = vpop.f32.mrb[0].mxu0
        %v1190 = vpop.f32.mrb[0].mxu0
        %v1191 = vadd.f32 %v1083, %v1190
        %v1192 = vpop.f32.mrb[0].mxu0
        %1193 = vdwg.mxu0
        %v1194 = vmax.f32 %v1164, 0.0
        %v1195 = vmax.f32 %v1167, 0.0
        %v1196 = vmax.f32 %v1172, 0.0
        %v1197 = vmax.f32 %v1175, 0.0
        %v1198 = vmax.f32 %v1180, 0.0
        %v1199 = vmax.f32 %v1183, 0.0
        %v1200 = vmax.f32 %v1188, 0.0
        %v1201 = vmax.f32 %v1191, 0.0
        %v1202 = vpack.c.bf16 %v1194, %v1194
        %v1203 = vpack.c.bf16 %v1195, %v1195
        %v1204 = vpack.c.bf16 %v1196, %v1196
        %v1205 = vpack.c.bf16 %v1197, %v1197
        %v1206 = vpack.c.bf16 %v1198, %v1198
        %v1207 = vpack.c.bf16 %v1199, %v1199
        %v1208 = vpack.c.bf16 %v1200, %v1200
        %v1209 = vpack.c.bf16 %v1201, %v1201
        %v1218 = vunpack.c.l.b16 %v1202
        %v1219 = vunpack.c.l.b16 %v1203
        %v1220 = vunpack.c.l.b16 %v1204
        %v1221 = vunpack.c.l.b16 %v1205
        %v1222 = vunpack.c.l.b16 %v1206
        %v1223 = vunpack.c.l.b16 %v1207
        %v1224 = vunpack.c.l.b16 %v1208
        %v1225 = vunpack.c.l.b16 %v1209
        %v1226 = vpack.c.b16 %v1218, %v1218
        %v1227 = vpack.c.b16 %v1219, %v1219
        %v1228 = vpack.c.b16 %v1220, %v1220
        %v1229 = vpack.c.b16 %v1221, %v1221
        %v1230 = vpack.c.b16 %v1222, %v1222
        %v1231 = vpack.c.b16 %v1223, %v1223
        %v1232 = vpack.c.b16 %v1224, %v1224
        %v1233 = vpack.c.b16 %v1225, %v1225
        %v1235 = vshrl.u32 %v1226, 16
        %v1237 = vrot.slane %v1235, 7
        %v1238 = vshll.u32 %v1226, 16
        %v1240 = vor.u32 %v1237, %v1238
        %v1241 = vrot.slane %v1237, 4
        %v1243 = vshrl.u32 %v1227, 16
        %v1245 = vrot.slane %v1243, 7
        %v1246 = vshll.u32 %v1227, 16
        %v1248 = vor.u32 %v1245, %v1246
        %v1249 = vrot.slane %v1245, 4
        %v1251 = vshrl.u32 %v1228, 16
        %v1253 = vrot.slane %v1251, 7
        %v1254 = vshll.u32 %v1228, 16
        %v1256 = vor.u32 %v1253, %v1254
        %v1257 = vrot.slane %v1253, 4
        %v1259 = vshrl.u32 %v1229, 16
        %v1261 = vrot.slane %v1259, 7
        %v1262 = vshll.u32 %v1229, 16
        %v1264 = vor.u32 %v1261, %v1262
        %v1265 = vrot.slane %v1261, 4
        %v1267 = vshrl.u32 %v1230, 16
        %v1269 = vrot.slane %v1267, 7
        %v1270 = vshll.u32 %v1230, 16
        %v1272 = vor.u32 %v1269, %v1270
        %v1273 = vrot.slane %v1269, 4
        %v1275 = vshrl.u32 %v1231, 16
        %v1277 = vrot.slane %v1275, 7
        %v1278 = vshll.u32 %v1231, 16
        %v1280 = vor.u32 %v1277, %v1278
        %v1281 = vrot.slane %v1277, 4
        %v1283 = vshrl.u32 %v1232, 16
        %v1285 = vrot.slane %v1283, 7
        %v1286 = vshll.u32 %v1232, 16
        %v1288 = vor.u32 %v1285, %v1286
        %v1289 = vrot.slane %v1285, 4
        %v1291 = vshrl.u32 %v1233, 16
        %v1293 = vrot.slane %v1291, 7
        %v1294 = vshll.u32 %v1233, 16
        %v1296 = vor.u32 %v1293, %v1294
        %v1297 = vrot.slane %v1293, 4
        %s1314 = scalar_lea.vmem [#allocation3], 8
        %vm1315 = vcmask 125952
        %vm1316 = vsmask.f32 7938
        %vm1317 = vmand %vm1315, %vm1316
        %v1318 = vld [vmem:[%s1314] sm:$0xf]
        %v1319 = vsel %vm1317, %v1240, %v1318
        %1320 = vst [vmem:[%s1314] sm:$0xf] %v1319
        %vm1321 = vcmask 122880
        %vm1322 = vsmask.f32 256
        %vm1323 = vmand %vm1321, %vm1322
        %v1324 = vld [vmem:[%s1314 + $0x4] sm:$0x1]
        %v1325 = vsel %vm1323, %v1241, %v1324
        %1326 = vst [vmem:[%s1314 + $0x4] sm:$0x1] %v1325
        %v1327 = vld [vmem:[%s1314 + $0x8] sm:$0xf]
        %v1328 = vsel %vm1317, %v1248, %v1327
        %1329 = vst [vmem:[%s1314 + $0x8] sm:$0xf] %v1328
        %v1330 = vld [vmem:[%s1314 + $0xc] sm:$0x1]
        %v1331 = vsel %vm1323, %v1249, %v1330
        %1332 = vst [vmem:[%s1314 + $0xc] sm:$0x1] %v1331
        %v1333 = vld [vmem:[%s1314 + $0x10] sm:$0xf]
        %v1334 = vsel %vm1317, %v1256, %v1333
        %1335 = vst [vmem:[%s1314 + $0x10] sm:$0xf] %v1334
        %v1336 = vld [vmem:[%s1314 + $0x14] sm:$0x1]
        %v1337 = vsel %vm1323, %v1257, %v1336
        %1338 = vst [vmem:[%s1314 + $0x14] sm:$0x1] %v1337
        %v1339 = vld [vmem:[%s1314 + $0x18] sm:$0xf]
        %v1340 = vsel %vm1317, %v1264, %v1339
        %1341 = vst [vmem:[%s1314 + $0x18] sm:$0xf] %v1340
        %v1342 = vld [vmem:[%s1314 + $0x1c] sm:$0x1]
        %v1343 = vsel %vm1323, %v1265, %v1342
        %1344 = vst [vmem:[%s1314 + $0x1c] sm:$0x1] %v1343
        %v1345 = vld [vmem:[%s1314 + $0x20] sm:$0xf]
        %v1346 = vsel %vm1317, %v1272, %v1345
        %1347 = vst [vmem:[%s1314 + $0x20] sm:$0xf] %v1346
        %v1348 = vld [vmem:[%s1314 + $0x24] sm:$0x1]
        %v1349 = vsel %vm1323, %v1273, %v1348
        %1350 = vst [vmem:[%s1314 + $0x24] sm:$0x1] %v1349
        %v1351 = vld [vmem:[%s1314 + $0x28] sm:$0xf]
        %v1352 = vsel %vm1317, %v1280, %v1351
        %1353 = vst [vmem:[%s1314 + $0x28] sm:$0xf] %v1352
        %v1354 = vld [vmem:[%s1314 + $0x2c] sm:$0x1]
        %v1355 = vsel %vm1323, %v1281, %v1354
        %1356 = vst [vmem:[%s1314 + $0x2c] sm:$0x1] %v1355
        %v1357 = vld [vmem:[%s1314 + $0x30] sm:$0xf]
        %v1358 = vsel %vm1317, %v1288, %v1357
        %1359 = vst [vmem:[%s1314 + $0x30] sm:$0xf] %v1358
        %v1360 = vld [vmem:[%s1314 + $0x34] sm:$0x1]
        %v1361 = vsel %vm1323, %v1289, %v1360
        %1362 = vst [vmem:[%s1314 + $0x34] sm:$0x1] %v1361
        %v1363 = vld [vmem:[%s1314 + $0x38] sm:$0xf]
        %v1364 = vsel %vm1317, %v1296, %v1363
        %1365 = vst [vmem:[%s1314 + $0x38] sm:$0xf] %v1364
        %v1366 = vld [vmem:[%s1314 + $0x3c] sm:$0x1]
        %v1367 = vsel %vm1323, %v1297, %v1366
        %1368 = vst [vmem:[%s1314 + $0x3c] sm:$0x1] %v1367
        %v1369 = vld [vmem:[#allocation3] sm:$0xf]
        %v1370 = vld [vmem:[#allocation3 + $0x8] sm:$0xf]
        %v1371 = vld [vmem:[#allocation3 + $0x10] sm:$0xf]
        %v1372 = vld [vmem:[#allocation3 + $0x18] sm:$0xf]
        %v1373 = vld [vmem:[#allocation3 + $0x20] sm:$0xf]
        %v1374 = vld [vmem:[#allocation3 + $0x28] sm:$0xf]
        %v1375 = vld [vmem:[#allocation3 + $0x30] sm:$0xf]
        %v1376 = vld [vmem:[#allocation3 + $0x38] sm:$0xf]
        %v1385 = vunpack.c.l.b16 %v1369
        %v1386 = vunpack.c.l.b16 %v1370
        %v1387 = vunpack.c.l.b16 %v1371
        %v1388 = vunpack.c.l.b16 %v1372
        %v1389 = vunpack.c.l.b16 %v1373
        %v1390 = vunpack.c.l.b16 %v1374
        %v1391 = vunpack.c.l.b16 %v1375
        %v1392 = vunpack.c.l.b16 %v1376
        %v1393 = vpack.c.b16 %v1386, %v1385
        %v1394 = vpack.c.b16 %v1388, %v1387
        %v1395 = vpack.c.b16 %v1390, %v1389
        %v1396 = vpack.c.b16 %v1392, %v1391
        %vm1401 = vcmask 130048
        %1402 = vst.msk [vmem:[#allocation4] sm:$0xff] %vm1401, %v1393
        %1403 = vst.msk [vmem:[#allocation4 + $0x10] sm:$0xff] %vm1401, %v1394
        %1404 = vst.msk [vmem:[#allocation4 + $0x20] sm:$0xff] %vm1401, %v1395
        %1405 = vst.msk [vmem:[#allocation4 + $0x30] sm:$0xff] %vm1401, %v1396
        %v1406 = vld [vmem:[#allocation3] sm:$0xf]
        %v1407 = vld [vmem:[#allocation3 + $0x4] sm:$0x1]
        %v1408 = vld [vmem:[#allocation3 + $0x8] sm:$0xf]
        %v1409 = vld [vmem:[#allocation3 + $0xc] sm:$0x1]
        %v1410 = vld [vmem:[#allocation3 + $0x10] sm:$0xf]
        %v1411 = vld [vmem:[#allocation3 + $0x14] sm:$0x1]
        %v1412 = vld [vmem:[#allocation3 + $0x18] sm:$0xf]
        %v1413 = vld [vmem:[#allocation3 + $0x1c] sm:$0x1]
        %v1414 = vld [vmem:[#allocation3 + $0x20] sm:$0xf]
        %v1415 = vld [vmem:[#allocation3 + $0x24] sm:$0x1]
        %v1416 = vld [vmem:[#allocation3 + $0x28] sm:$0xf]
        %v1417 = vld [vmem:[#allocation3 + $0x2c] sm:$0x1]
        %v1418 = vld [vmem:[#allocation3 + $0x30] sm:$0xf]
        %v1419 = vld [vmem:[#allocation3 + $0x34] sm:$0x1]
        %v1420 = vld [vmem:[#allocation3 + $0x38] sm:$0xf]
        %v1421 = vld [vmem:[#allocation3 + $0x3c] sm:$0x1]
        %v1423 = vshrl.u32 %v1406, 16
        %v1425 = vrot.slane %v1423, 4
        %v1426 = vshll.u32 %v1406, 16
        %v1428 = vrot.slane %v1426, 5
        %v1429 = vor.u32 %v1425, %v1428
        %v1430 = vrot.slane %v1429, 4
        %v1432 = vshll.u32 %v1407, 16
        %v1434 = vrot.slane %v1432, 5
        %v1435 = vsel %vm425, %v1430, %v1434
        %v1437 = vshrl.u32 %v1408, 16
        %v1439 = vrot.slane %v1437, 4
        %v1440 = vshll.u32 %v1408, 16
        %v1442 = vrot.slane %v1440, 5
        %v1443 = vor.u32 %v1439, %v1442
        %v1444 = vrot.slane %v1443, 4
        %v1446 = vshll.u32 %v1409, 16
        %v1448 = vrot.slane %v1446, 5
        %v1449 = vsel %vm425, %v1444, %v1448
        %v1451 = vshrl.u32 %v1410, 16
        %v1453 = vrot.slane %v1451, 4
        %v1454 = vshll.u32 %v1410, 16
        %v1456 = vrot.slane %v1454, 5
        %v1457 = vor.u32 %v1453, %v1456
        %v1458 = vrot.slane %v1457, 4
        %v1460 = vshll.u32 %v1411, 16
        %v1462 = vrot.slane %v1460, 5
        %v1463 = vsel %vm425, %v1458, %v1462
        %v1465 = vshrl.u32 %v1412, 16
        %v1467 = vrot.slane %v1465, 4
        %v1468 = vshll.u32 %v1412, 16
        %v1470 = vrot.slane %v1468, 5
        %v1471 = vor.u32 %v1467, %v1470
        %v1472 = vrot.slane %v1471, 4
        %v1474 = vshll.u32 %v1413, 16
        %v1476 = vrot.slane %v1474, 5
        %v1477 = vsel %vm425, %v1472, %v1476
        %v1479 = vshrl.u32 %v1414, 16
        %v1481 = vrot.slane %v1479, 4
        %v1482 = vshll.u32 %v1414, 16
        %v1484 = vrot.slane %v1482, 5
        %v1485 = vor.u32 %v1481, %v1484
        %v1486 = vrot.slane %v1485, 4
        %v1488 = vshll.u32 %v1415, 16
        %v1490 = vrot.slane %v1488, 5
        %v1491 = vsel %vm425, %v1486, %v1490
        %v1493 = vshrl.u32 %v1416, 16
        %v1495 = vrot.slane %v1493, 4
        %v1496 = vshll.u32 %v1416, 16
        %v1498 = vrot.slane %v1496, 5
        %v1499 = vor.u32 %v1495, %v1498
        %v1500 = vrot.slane %v1499, 4
        %v1502 = vshll.u32 %v1417, 16
        %v1504 = vrot.slane %v1502, 5
        %v1505 = vsel %vm425, %v1500, %v1504
        %v1507 = vshrl.u32 %v1418, 16
        %v1509 = vrot.slane %v1507, 4
        %v1510 = vshll.u32 %v1418, 16
        %v1512 = vrot.slane %v1510, 5
        %v1513 = vor.u32 %v1509, %v1512
        %v1514 = vrot.slane %v1513, 4
        %v1516 = vshll.u32 %v1419, 16
        %v1518 = vrot.slane %v1516, 5
        %v1519 = vsel %vm425, %v1514, %v1518
        %v1521 = vshrl.u32 %v1420, 16
        %v1523 = vrot.slane %v1521, 4
        %v1524 = vshll.u32 %v1420, 16
        %v1526 = vrot.slane %v1524, 5
        %v1527 = vor.u32 %v1523, %v1526
        %v1528 = vrot.slane %v1527, 4
        %v1530 = vshll.u32 %v1421, 16
        %v1532 = vrot.slane %v1530, 5
        %v1533 = vsel %vm425, %v1528, %v1532
        %v1534 = vunpack.c.l.b16 %v1435
        %v1535 = vunpack.c.l.b16 %v1449
        %v1536 = vunpack.c.l.b16 %v1463
        %v1537 = vunpack.c.l.b16 %v1477
        %v1538 = vunpack.c.l.b16 %v1491
        %v1539 = vunpack.c.l.b16 %v1505
        %v1540 = vunpack.c.l.b16 %v1519
        %v1541 = vunpack.c.l.b16 %v1533
        %v1542 = vpack.c.b16 %v1535, %v1534
        %v1543 = vpack.c.b16 %v1537, %v1536
        %v1544 = vpack.c.b16 %v1539, %v1538
        %v1545 = vpack.c.b16 %v1541, %v1540
        %1546 = vrot.lane.b32.xlu0 %v1542, 16
        %v1547 = vpop.permute.xlu0 %1546
        %1548 = vrot.lane.b32.xlu0 %v1543, 16
        %v1549 = vpop.permute.xlu0 %1548
        %1550 = vrot.lane.b32.xlu0 %v1544, 16
        %v1551 = vpop.permute.xlu0 %1550
        %1552 = vrot.lane.b32.xlu0 %v1545, 16
        %v1553 = vpop.permute.xlu0 %1552
        %vm1558 = vcmask 261248
        %1559 = vst.msk [vmem:[#allocation4] sm:$0xff] %vm1558, %v1547
        %1560 = vst.msk [vmem:[#allocation4 + $0x10] sm:$0xff] %vm1558, %v1549
        %1561 = vst.msk [vmem:[#allocation4 + $0x20] sm:$0xff] %vm1558, %v1551
        %1562 = vst.msk [vmem:[#allocation4 + $0x30] sm:$0xff] %vm1558, %v1553
        %v1563 = vld [vmem:[#allocation3] sm:$0xe]
        %v1564 = vld [vmem:[#allocation3 + $0x4] sm:$0x1]
        %v1565 = vld [vmem:[#allocation3 + $0x8] sm:$0xe]
        %v1566 = vld [vmem:[#allocation3 + $0xc] sm:$0x1]
        %v1567 = vld [vmem:[#allocation3 + $0x10] sm:$0xe]
        %v1568 = vld [vmem:[#allocation3 + $0x14] sm:$0x1]
        %v1569 = vld [vmem:[#allocation3 + $0x18] sm:$0xe]
        %v1570 = vld [vmem:[#allocation3 + $0x1c] sm:$0x1]
        %v1571 = vld [vmem:[#allocation3 + $0x20] sm:$0xe]
        %v1572 = vld [vmem:[#allocation3 + $0x24] sm:$0x1]
        %v1573 = vld [vmem:[#allocation3 + $0x28] sm:$0xe]
        %v1574 = vld [vmem:[#allocation3 + $0x2c] sm:$0x1]
        %v1575 = vld [vmem:[#allocation3 + $0x30] sm:$0xe]
        %v1576 = vld [vmem:[#allocation3 + $0x34] sm:$0x1]
        %v1577 = vld [vmem:[#allocation3 + $0x38] sm:$0xe]
        %v1578 = vld [vmem:[#allocation3 + $0x3c] sm:$0x1]
        %vm1595 = vcmask 1042432
        %vm1596 = vcmask 1046532
        %vm1597 = vmor %vm1595, %vm1596
        %v1598 = vrot.slane %v1563, 5
        %v1599 = vrot.slane %v1598, 4
        %v1600 = vrot.slane %v1564, 5
        %v1601 = vsel %vm1597, %v1599, %v1600
        %v1602 = vrot.slane %v1565, 5
        %v1603 = vrot.slane %v1602, 4
        %v1604 = vrot.slane %v1566, 5
        %v1605 = vsel %vm1597, %v1603, %v1604
        %v1606 = vrot.slane %v1567, 5
        %v1607 = vrot.slane %v1606, 4
        %v1608 = vrot.slane %v1568, 5
        %v1609 = vsel %vm1597, %v1607, %v1608
        %v1610 = vrot.slane %v1569, 5
        %v1611 = vrot.slane %v1610, 4
        %v1612 = vrot.slane %v1570, 5
        %v1613 = vsel %vm1597, %v1611, %v1612
        %v1614 = vrot.slane %v1571, 5
        %v1615 = vrot.slane %v1614, 4
        %v1616 = vrot.slane %v1572, 5
        %v1617 = vsel %vm1597, %v1615, %v1616
        %v1618 = vrot.slane %v1573, 5
        %v1619 = vrot.slane %v1618, 4
        %v1620 = vrot.slane %v1574, 5
        %v1621 = vsel %vm1597, %v1619, %v1620
        %v1622 = vrot.slane %v1575, 5
        %v1623 = vrot.slane %v1622, 4
        %v1624 = vrot.slane %v1576, 5
        %v1625 = vsel %vm1597, %v1623, %v1624
        %v1626 = vrot.slane %v1577, 5
        %v1627 = vrot.slane %v1626, 4
        %v1628 = vrot.slane %v1578, 5
        %v1629 = vsel %vm1597, %v1627, %v1628
        %v1630 = vunpack.c.l.b16 %v1601
        %v1631 = vunpack.c.l.b16 %v1605
        %v1632 = vunpack.c.l.b16 %v1609
        %v1633 = vunpack.c.l.b16 %v1613
        %v1634 = vunpack.c.l.b16 %v1617
        %v1635 = vunpack.c.l.b16 %v1621
        %v1636 = vunpack.c.l.b16 %v1625
        %v1637 = vunpack.c.l.b16 %v1629
        %v1638 = vpack.c.b16 %v1631, %v1630
        %v1639 = vpack.c.b16 %v1633, %v1632
        %v1640 = vpack.c.b16 %v1635, %v1634
        %v1641 = vpack.c.b16 %v1637, %v1636
        %1642 = vrot.lane.b32.xlu0 %v1638, 32
        %v1643 = vpop.permute.xlu0 %1642
        %1644 = vrot.lane.b32.xlu0 %v1639, 32
        %v1645 = vpop.permute.xlu0 %1644
        %1646 = vrot.lane.b32.xlu0 %v1640, 32
        %v1647 = vpop.permute.xlu0 %1646
        %1648 = vrot.lane.b32.xlu0 %v1641, 32
        %v1649 = vpop.permute.xlu0 %1648
        %vm1654 = vcmask 392448
        %1655 = vst.msk [vmem:[#allocation4] sm:$0xff] %vm1654, %v1643
        %1656 = vst.msk [vmem:[#allocation4 + $0x10] sm:$0xff] %vm1654, %v1645
        %1657 = vst.msk [vmem:[#allocation4 + $0x20] sm:$0xff] %vm1654, %v1647
        %1658 = vst.msk [vmem:[#allocation4 + $0x30] sm:$0xff] %vm1654, %v1649
        %v1659 = vld [vmem:[%s1314] sm:$0xf]
        %v1660 = vld [vmem:[%s1314 + $0x8] sm:$0xf]
        %v1661 = vld [vmem:[%s1314 + $0x10] sm:$0xf]
        %v1662 = vld [vmem:[%s1314 + $0x18] sm:$0xf]
        %v1663 = vld [vmem:[%s1314 + $0x20] sm:$0xf]
        %v1664 = vld [vmem:[%s1314 + $0x28] sm:$0xf]
        %v1665 = vld [vmem:[%s1314 + $0x30] sm:$0xf]
        %v1666 = vld [vmem:[%s1314 + $0x38] sm:$0xf]
        %v1675 = vunpack.c.l.b16 %v1659
        %v1676 = vunpack.c.l.b16 %v1660
        %v1677 = vunpack.c.l.b16 %v1661
        %v1678 = vunpack.c.l.b16 %v1662
        %v1679 = vunpack.c.l.b16 %v1663
        %v1680 = vunpack.c.l.b16 %v1664
        %v1681 = vunpack.c.l.b16 %v1665
        %v1682 = vunpack.c.l.b16 %v1666
        %v1683 = vpack.c.b16 %v1676, %v1675
        %v1684 = vpack.c.b16 %v1678, %v1677
        %v1685 = vpack.c.b16 %v1680, %v1679
        %v1686 = vpack.c.b16 %v1682, %v1681
        %1687 = vrot.lane.b32.xlu0 %v1683, 48
        %v1688 = vpop.permute.xlu0 %1687
        %1689 = vrot.lane.b32.xlu0 %v1684, 48
        %v1690 = vpop.permute.xlu0 %1689
        %1691 = vrot.lane.b32.xlu0 %v1685, 48
        %v1692 = vpop.permute.xlu0 %1691
        %1693 = vrot.lane.b32.xlu0 %v1686, 48
        %v1694 = vpop.permute.xlu0 %1693
        %vm1699 = vcmask 523648
        %1700 = vst.msk [vmem:[#allocation4] sm:$0xff] %vm1699, %v1688
        %1701 = vst.msk [vmem:[#allocation4 + $0x10] sm:$0xff] %vm1699, %v1690
        %1702 = vst.msk [vmem:[#allocation4 + $0x20] sm:$0xff] %vm1699, %v1692
        %1703 = vst.msk [vmem:[#allocation4 + $0x30] sm:$0xff] %vm1699, %v1694
        %v1704 = vld [vmem:[%s1314] sm:$0xf]
        %v1705 = vld [vmem:[%s1314 + $0x4] sm:$0x1]
        %v1706 = vld [vmem:[%s1314 + $0x8] sm:$0xf]
        %v1707 = vld [vmem:[%s1314 + $0xc] sm:$0x1]
        %v1708 = vld [vmem:[%s1314 + $0x10] sm:$0xf]
        %v1709 = vld [vmem:[%s1314 + $0x14] sm:$0x1]
        %v1710 = vld [vmem:[%s1314 + $0x18] sm:$0xf]
        %v1711 = vld [vmem:[%s1314 + $0x1c] sm:$0x1]
        %v1712 = vld [vmem:[%s1314 + $0x20] sm:$0xf]
        %v1713 = vld [vmem:[%s1314 + $0x24] sm:$0x1]
        %v1714 = vld [vmem:[%s1314 + $0x28] sm:$0xf]
        %v1715 = vld [vmem:[%s1314 + $0x2c] sm:$0x1]
        %v1716 = vld [vmem:[%s1314 + $0x30] sm:$0xf]
        %v1717 = vld [vmem:[%s1314 + $0x34] sm:$0x1]
        %v1718 = vld [vmem:[%s1314 + $0x38] sm:$0xf]
        %v1719 = vld [vmem:[%s1314 + $0x3c] sm:$0x1]
        %v1721 = vshrl.u32 %v1704, 16
        %v1723 = vrot.slane %v1721, 4
        %v1724 = vshll.u32 %v1704, 16
        %v1726 = vrot.slane %v1724, 5
        %v1727 = vor.u32 %v1723, %v1726
        %v1728 = vrot.slane %v1727, 4
        %v1730 = vshll.u32 %v1705, 16
        %v1732 = vrot.slane %v1730, 5
        %v1733 = vsel %vm425, %v1728, %v1732
        %v1735 = vshrl.u32 %v1706, 16
        %v1737 = vrot.slane %v1735, 4
        %v1738 = vshll.u32 %v1706, 16
        %v1740 = vrot.slane %v1738, 5
        %v1741 = vor.u32 %v1737, %v1740
        %v1742 = vrot.slane %v1741, 4
        %v1744 = vshll.u32 %v1707, 16
        %v1746 = vrot.slane %v1744, 5
        %v1747 = vsel %vm425, %v1742, %v1746
        %v1749 = vshrl.u32 %v1708, 16
        %v1751 = vrot.slane %v1749, 4
        %v1752 = vshll.u32 %v1708, 16
        %v1754 = vrot.slane %v1752, 5
        %v1755 = vor.u32 %v1751, %v1754
        %v1756 = vrot.slane %v1755, 4
        %v1758 = vshll.u32 %v1709, 16
        %v1760 = vrot.slane %v1758, 5
        %v1761 = vsel %vm425, %v1756, %v1760
        %v1763 = vshrl.u32 %v1710, 16
        %v1765 = vrot.slane %v1763, 4
        %v1766 = vshll.u32 %v1710, 16
        %v1768 = vrot.slane %v1766, 5
        %v1769 = vor.u32 %v1765, %v1768
        %v1770 = vrot.slane %v1769, 4
        %v1772 = vshll.u32 %v1711, 16
        %v1774 = vrot.slane %v1772, 5
        %v1775 = vsel %vm425, %v1770, %v1774
        %v1777 = vshrl.u32 %v1712, 16
        %v1779 = vrot.slane %v1777, 4
        %v1780 = vshll.u32 %v1712, 16
        %v1782 = vrot.slane %v1780, 5
        %v1783 = vor.u32 %v1779, %v1782
        %v1784 = vrot.slane %v1783, 4
        %v1786 = vshll.u32 %v1713, 16
        %v1788 = vrot.slane %v1786, 5
        %v1789 = vsel %vm425, %v1784, %v1788
        %v1791 = vshrl.u32 %v1714, 16
        %v1793 = vrot.slane %v1791, 4
        %v1794 = vshll.u32 %v1714, 16
        %v1796 = vrot.slane %v1794, 5
        %v1797 = vor.u32 %v1793, %v1796
        %v1798 = vrot.slane %v1797, 4
        %v1800 = vshll.u32 %v1715, 16
        %v1802 = vrot.slane %v1800, 5
        %v1803 = vsel %vm425, %v1798, %v1802
        %v1805 = vshrl.u32 %v1716, 16
        %v1807 = vrot.slane %v1805, 4
        %v1808 = vshll.u32 %v1716, 16
        %v1810 = vrot.slane %v1808, 5
        %v1811 = vor.u32 %v1807, %v1810
        %v1812 = vrot.slane %v1811, 4
        %v1814 = vshll.u32 %v1717, 16
        %v1816 = vrot.slane %v1814, 5
        %v1817 = vsel %vm425, %v1812, %v1816
        %v1819 = vshrl.u32 %v1718, 16
        %v1821 = vrot.slane %v1819, 4
        %v1822 = vshll.u32 %v1718, 16
        %v1824 = vrot.slane %v1822, 5
        %v1825 = vor.u32 %v1821, %v1824
        %v1826 = vrot.slane %v1825, 4
        %v1828 = vshll.u32 %v1719, 16
        %v1830 = vrot.slane %v1828, 5
        %v1831 = vsel %vm425, %v1826, %v1830
        %v1832 = vunpack.c.l.b16 %v1733
        %v1833 = vunpack.c.l.b16 %v1747
        %v1834 = vunpack.c.l.b16 %v1761
        %v1835 = vunpack.c.l.b16 %v1775
        %v1836 = vunpack.c.l.b16 %v1789
        %v1837 = vunpack.c.l.b16 %v1803
        %v1838 = vunpack.c.l.b16 %v1817
        %v1839 = vunpack.c.l.b16 %v1831
        %v1840 = vpack.c.b16 %v1833, %v1832
        %v1841 = vpack.c.b16 %v1835, %v1834
        %v1842 = vpack.c.b16 %v1837, %v1836
        %v1843 = vpack.c.b16 %v1839, %v1838
        %1844 = vrot.lane.b32.xlu0 %v1840, 64
        %v1845 = vpop.permute.xlu0 %1844
        %1846 = vrot.lane.b32.xlu0 %v1841, 64
        %v1847 = vpop.permute.xlu0 %1846
        %1848 = vrot.lane.b32.xlu0 %v1842, 64
        %v1849 = vpop.permute.xlu0 %1848
        %1850 = vrot.lane.b32.xlu0 %v1843, 64
        %v1851 = vpop.permute.xlu0 %1850
        %vm1856 = vcmask 654848
        %1857 = vst.msk [vmem:[#allocation4] sm:$0xff] %vm1856, %v1845
        %1858 = vst.msk [vmem:[#allocation4 + $0x10] sm:$0xff] %vm1856, %v1847
        %1859 = vst.msk [vmem:[#allocation4 + $0x20] sm:$0xff] %vm1856, %v1849
        %1860 = vst.msk [vmem:[#allocation4 + $0x30] sm:$0xff] %vm1856, %v1851
        %v1861 = vld [vmem:[%s1314] sm:$0xe]
        %v1862 = vld [vmem:[%s1314 + $0x4] sm:$0x1]
        %v1863 = vld [vmem:[%s1314 + $0x8] sm:$0xe]
        %v1864 = vld [vmem:[%s1314 + $0xc] sm:$0x1]
        %v1865 = vld [vmem:[%s1314 + $0x10] sm:$0xe]
        %v1866 = vld [vmem:[%s1314 + $0x14] sm:$0x1]
        %v1867 = vld [vmem:[%s1314 + $0x18] sm:$0xe]
        %v1868 = vld [vmem:[%s1314 + $0x1c] sm:$0x1]
        %v1869 = vld [vmem:[%s1314 + $0x20] sm:$0xe]
        %v1870 = vld [vmem:[%s1314 + $0x24] sm:$0x1]
        %v1871 = vld [vmem:[%s1314 + $0x28] sm:$0xe]
        %v1872 = vld [vmem:[%s1314 + $0x2c] sm:$0x1]
        %v1873 = vld [vmem:[%s1314 + $0x30] sm:$0xe]
        %v1874 = vld [vmem:[%s1314 + $0x34] sm:$0x1]
        %v1875 = vld [vmem:[%s1314 + $0x38] sm:$0xe]
        %v1876 = vld [vmem:[%s1314 + $0x3c] sm:$0x1]
        %v1893 = vrot.slane %v1861, 5
        %v1894 = vrot.slane %v1893, 4
        %v1895 = vrot.slane %v1862, 5
        %v1896 = vsel %vm1597, %v1894, %v1895
        %v1897 = vrot.slane %v1863, 5
        %v1898 = vrot.slane %v1897, 4
        %v1899 = vrot.slane %v1864, 5
        %v1900 = vsel %vm1597, %v1898, %v1899
        %v1901 = vrot.slane %v1865, 5
        %v1902 = vrot.slane %v1901, 4
        %v1903 = vrot.slane %v1866, 5
        %v1904 = vsel %vm1597, %v1902, %v1903
        %v1905 = vrot.slane %v1867, 5
        %v1906 = vrot.slane %v1905, 4
        %v1907 = vrot.slane %v1868, 5
        %v1908 = vsel %vm1597, %v1906, %v1907
        %v1909 = vrot.slane %v1869, 5
        %v1910 = vrot.slane %v1909, 4
        %v1911 = vrot.slane %v1870, 5
        %v1912 = vsel %vm1597, %v1910, %v1911
        %v1913 = vrot.slane %v1871, 5
        %v1914 = vrot.slane %v1913, 4
        %v1915 = vrot.slane %v1872, 5
        %v1916 = vsel %vm1597, %v1914, %v1915
        %v1917 = vrot.slane %v1873, 5
        %v1918 = vrot.slane %v1917, 4
        %v1919 = vrot.slane %v1874, 5
        %v1920 = vsel %vm1597, %v1918, %v1919
        %v1921 = vrot.slane %v1875, 5
        %v1922 = vrot.slane %v1921, 4
        %v1923 = vrot.slane %v1876, 5
        %v1924 = vsel %vm1597, %v1922, %v1923
        %v1925 = vunpack.c.l.b16 %v1896
        %v1926 = vunpack.c.l.b16 %v1900
        %v1927 = vunpack.c.l.b16 %v1904
        %v1928 = vunpack.c.l.b16 %v1908
        %v1929 = vunpack.c.l.b16 %v1912
        %v1930 = vunpack.c.l.b16 %v1916
        %v1931 = vunpack.c.l.b16 %v1920
        %v1932 = vunpack.c.l.b16 %v1924
        %v1933 = vpack.c.b16 %v1926, %v1925
        %v1934 = vpack.c.b16 %v1928, %v1927
        %v1935 = vpack.c.b16 %v1930, %v1929
        %v1936 = vpack.c.b16 %v1932, %v1931
        %1937 = vrot.lane.b32.xlu0 %v1933, 80
        %v1938 = vpop.permute.xlu0 %1937
        %1939 = vrot.lane.b32.xlu0 %v1934, 80
        %v1940 = vpop.permute.xlu0 %1939
        %1941 = vrot.lane.b32.xlu0 %v1935, 80
        %v1942 = vpop.permute.xlu0 %1941
        %1943 = vrot.lane.b32.xlu0 %v1936, 80
        %v1944 = vpop.permute.xlu0 %1943
        %vm1949 = vcmask 786048
        %1950 = vst.msk [vmem:[#allocation4] sm:$0xff] %vm1949, %v1938
        %1951 = vst.msk [vmem:[#allocation4 + $0x10] sm:$0xff] %vm1949, %v1940
        %1952 = vst.msk [vmem:[#allocation4 + $0x20] sm:$0xff] %vm1949, %v1942
        %1953 = vst.msk [vmem:[#allocation4 + $0x30] sm:$0xff] %vm1949, %v1944
        %s1954 = scalar_lea.vmem [#allocation3], 16
        %v1955 = vld [vmem:[%s1954] sm:$0xf]
        %v1956 = vld [vmem:[%s1954 + $0x8] sm:$0xf]
        %v1957 = vld [vmem:[%s1954 + $0x10] sm:$0xf]
        %v1958 = vld [vmem:[%s1954 + $0x18] sm:$0xf]
        %v1959 = vld [vmem:[%s1954 + $0x20] sm:$0xf]
        %v1960 = vld [vmem:[%s1954 + $0x28] sm:$0xf]
        %v1961 = vld [vmem:[%s1954 + $0x30] sm:$0xf]
        %v1962 = vld [vmem:[%s1954 + $0x38] sm:$0xf]
        %v1971 = vunpack.c.l.b16 %v1955
        %v1972 = vunpack.c.l.b16 %v1956
        %v1973 = vunpack.c.l.b16 %v1957
        %v1974 = vunpack.c.l.b16 %v1958
        %v1975 = vunpack.c.l.b16 %v1959
        %v1976 = vunpack.c.l.b16 %v1960
        %v1977 = vunpack.c.l.b16 %v1961
        %v1978 = vunpack.c.l.b16 %v1962
        %v1979 = vpack.c.b16 %v1972, %v1971
        %v1980 = vpack.c.b16 %v1974, %v1973
        %v1981 = vpack.c.b16 %v1976, %v1975
        %v1982 = vpack.c.b16 %v1978, %v1977
        %1983 = vrot.lane.b32.xlu0 %v1979, 96
        %v1984 = vpop.permute.xlu0 %1983
        %1985 = vrot.lane.b32.xlu0 %v1980, 96
        %v1986 = vpop.permute.xlu0 %1985
        %1987 = vrot.lane.b32.xlu0 %v1981, 96
        %v1988 = vpop.permute.xlu0 %1987
        %1989 = vrot.lane.b32.xlu0 %v1982, 96
        %v1990 = vpop.permute.xlu0 %1989
        %vm1995 = vcmask 917248
        %1996 = vst.msk [vmem:[#allocation4] sm:$0xff] %vm1995, %v1984
        %1997 = vst.msk [vmem:[#allocation4 + $0x10] sm:$0xff] %vm1995, %v1986
        %1998 = vst.msk [vmem:[#allocation4 + $0x20] sm:$0xff] %vm1995, %v1988
        %1999 = vst.msk [vmem:[#allocation4 + $0x30] sm:$0xff] %vm1995, %v1990
        %v2000 = vld [vmem:[%s1954] sm:$0xf]
        %v2001 = vld [vmem:[%s1954 + $0x4] sm:$0x1]
        %v2002 = vld [vmem:[%s1954 + $0x8] sm:$0xf]
        %v2003 = vld [vmem:[%s1954 + $0xc] sm:$0x1]
        %v2004 = vld [vmem:[%s1954 + $0x10] sm:$0xf]
        %v2005 = vld [vmem:[%s1954 + $0x14] sm:$0x1]
        %v2006 = vld [vmem:[%s1954 + $0x18] sm:$0xf]
        %v2007 = vld [vmem:[%s1954 + $0x1c] sm:$0x1]
        %v2008 = vld [vmem:[%s1954 + $0x20] sm:$0xf]
        %v2009 = vld [vmem:[%s1954 + $0x24] sm:$0x1]
        %v2010 = vld [vmem:[%s1954 + $0x28] sm:$0xf]
        %v2011 = vld [vmem:[%s1954 + $0x2c] sm:$0x1]
        %v2012 = vld [vmem:[%s1954 + $0x30] sm:$0xf]
        %v2013 = vld [vmem:[%s1954 + $0x34] sm:$0x1]
        %v2014 = vld [vmem:[%s1954 + $0x38] sm:$0xf]
        %v2015 = vld [vmem:[%s1954 + $0x3c] sm:$0x1]
        %v2017 = vshrl.u32 %v2000, 16
        %v2019 = vrot.slane %v2017, 4
        %v2020 = vshll.u32 %v2000, 16
        %v2022 = vrot.slane %v2020, 5
        %v2023 = vor.u32 %v2019, %v2022
        %v2024 = vrot.slane %v2023, 4
        %v2026 = vshll.u32 %v2001, 16
        %v2028 = vrot.slane %v2026, 5
        %v2029 = vsel %vm425, %v2024, %v2028
        %v2031 = vshrl.u32 %v2002, 16
        %v2033 = vrot.slane %v2031, 4
        %v2034 = vshll.u32 %v2002, 16
        %v2036 = vrot.slane %v2034, 5
        %v2037 = vor.u32 %v2033, %v2036
        %v2038 = vrot.slane %v2037, 4
        %v2040 = vshll.u32 %v2003, 16
        %v2042 = vrot.slane %v2040, 5
        %v2043 = vsel %vm425, %v2038, %v2042
        %v2045 = vshrl.u32 %v2004, 16
        %v2047 = vrot.slane %v2045, 4
        %v2048 = vshll.u32 %v2004, 16
        %v2050 = vrot.slane %v2048, 5
        %v2051 = vor.u32 %v2047, %v2050
        %v2052 = vrot.slane %v2051, 4
        %v2054 = vshll.u32 %v2005, 16
        %v2056 = vrot.slane %v2054, 5
        %v2057 = vsel %vm425, %v2052, %v2056
        %v2059 = vshrl.u32 %v2006, 16
        %v2061 = vrot.slane %v2059, 4
        %v2062 = vshll.u32 %v2006, 16
        %v2064 = vrot.slane %v2062, 5
        %v2065 = vor.u32 %v2061, %v2064
        %v2066 = vrot.slane %v2065, 4
        %v2068 = vshll.u32 %v2007, 16
        %v2070 = vrot.slane %v2068, 5
        %v2071 = vsel %vm425, %v2066, %v2070
        %v2073 = vshrl.u32 %v2008, 16
        %v2075 = vrot.slane %v2073, 4
        %v2076 = vshll.u32 %v2008, 16
        %v2078 = vrot.slane %v2076, 5
        %v2079 = vor.u32 %v2075, %v2078
        %v2080 = vrot.slane %v2079, 4
        %v2082 = vshll.u32 %v2009, 16
        %v2084 = vrot.slane %v2082, 5
        %v2085 = vsel %vm425, %v2080, %v2084
        %v2087 = vshrl.u32 %v2010, 16
        %v2089 = vrot.slane %v2087, 4
        %v2090 = vshll.u32 %v2010, 16
        %v2092 = vrot.slane %v2090, 5
        %v2093 = vor.u32 %v2089, %v2092
        %v2094 = vrot.slane %v2093, 4
        %v2096 = vshll.u32 %v2011, 16
        %v2098 = vrot.slane %v2096, 5
        %v2099 = vsel %vm425, %v2094, %v2098
        %v2101 = vshrl.u32 %v2012, 16
        %v2103 = vrot.slane %v2101, 4
        %v2104 = vshll.u32 %v2012, 16
        %v2106 = vrot.slane %v2104, 5
        %v2107 = vor.u32 %v2103, %v2106
        %v2108 = vrot.slane %v2107, 4
        %v2110 = vshll.u32 %v2013, 16
        %v2112 = vrot.slane %v2110, 5
        %v2113 = vsel %vm425, %v2108, %v2112
        %v2115 = vshrl.u32 %v2014, 16
        %v2117 = vrot.slane %v2115, 4
        %v2118 = vshll.u32 %v2014, 16
        %v2120 = vrot.slane %v2118, 5
        %v2121 = vor.u32 %v2117, %v2120
        %v2122 = vrot.slane %v2121, 4
        %v2124 = vshll.u32 %v2015, 16
        %v2126 = vrot.slane %v2124, 5
        %v2127 = vsel %vm425, %v2122, %v2126
        %v2128 = vunpack.c.l.b16 %v2029
        %v2129 = vunpack.c.l.b16 %v2043
        %v2130 = vunpack.c.l.b16 %v2057
        %v2131 = vunpack.c.l.b16 %v2071
        %v2132 = vunpack.c.l.b16 %v2085
        %v2133 = vunpack.c.l.b16 %v2099
        %v2134 = vunpack.c.l.b16 %v2113
        %v2135 = vunpack.c.l.b16 %v2127
        %v2136 = vpack.c.b16 %v2129, %v2128
        %v2137 = vpack.c.b16 %v2131, %v2130
        %v2138 = vpack.c.b16 %v2133, %v2132
        %v2139 = vpack.c.b16 %v2135, %v2134
        %2140 = vrot.lane.b32.xlu0 %v2136, 112
        %v2141 = vpop.permute.xlu0 %2140
        %2142 = vrot.lane.b32.xlu0 %v2137, 112
        %v2143 = vpop.permute.xlu0 %2142
        %2144 = vrot.lane.b32.xlu0 %v2138, 112
        %v2145 = vpop.permute.xlu0 %2144
        %2146 = vrot.lane.b32.xlu0 %v2139, 112
        %v2147 = vpop.permute.xlu0 %2146
        %vm2152 = vcmask 1048448
        %2153 = vst.msk [vmem:[#allocation4] sm:$0xff] %vm2152, %v2141
        %2154 = vst.msk [vmem:[#allocation4 + $0x10] sm:$0xff] %vm2152, %v2143
        %2155 = vst.msk [vmem:[#allocation4 + $0x20] sm:$0xff] %vm2152, %v2145
        %2156 = vst.msk [vmem:[#allocation4 + $0x30] sm:$0xff] %vm2152, %v2147
        %v2157 = vld [vmem:[%s1954] sm:$0xe]
        %v2158 = vld [vmem:[%s1954 + $0x4] sm:$0x1]
        %v2159 = vld [vmem:[%s1954 + $0x8] sm:$0xe]
        %v2160 = vld [vmem:[%s1954 + $0xc] sm:$0x1]
        %v2161 = vld [vmem:[%s1954 + $0x10] sm:$0xe]
        %v2162 = vld [vmem:[%s1954 + $0x14] sm:$0x1]
        %v2163 = vld [vmem:[%s1954 + $0x18] sm:$0xe]
        %v2164 = vld [vmem:[%s1954 + $0x1c] sm:$0x1]
        %v2165 = vld [vmem:[%s1954 + $0x20] sm:$0xe]
        %v2166 = vld [vmem:[%s1954 + $0x24] sm:$0x1]
        %v2167 = vld [vmem:[%s1954 + $0x28] sm:$0xe]
        %v2168 = vld [vmem:[%s1954 + $0x2c] sm:$0x1]
        %v2169 = vld [vmem:[%s1954 + $0x30] sm:$0xe]
        %v2170 = vld [vmem:[%s1954 + $0x34] sm:$0x1]
        %v2171 = vld [vmem:[%s1954 + $0x38] sm:$0xe]
        %v2172 = vld [vmem:[%s1954 + $0x3c] sm:$0x1]
        %v2189 = vrot.slane %v2157, 5
        %v2190 = vrot.slane %v2189, 4
        %v2191 = vrot.slane %v2158, 5
        %v2192 = vsel %vm1597, %v2190, %v2191
        %v2193 = vrot.slane %v2159, 5
        %v2194 = vrot.slane %v2193, 4
        %v2195 = vrot.slane %v2160, 5
        %v2196 = vsel %vm1597, %v2194, %v2195
        %v2197 = vrot.slane %v2161, 5
        %v2198 = vrot.slane %v2197, 4
        %v2199 = vrot.slane %v2162, 5
        %v2200 = vsel %vm1597, %v2198, %v2199
        %v2201 = vrot.slane %v2163, 5
        %v2202 = vrot.slane %v2201, 4
        %v2203 = vrot.slane %v2164, 5
        %v2204 = vsel %vm1597, %v2202, %v2203
        %v2205 = vrot.slane %v2165, 5
        %v2206 = vrot.slane %v2205, 4
        %v2207 = vrot.slane %v2166, 5
        %v2208 = vsel %vm1597, %v2206, %v2207
        %v2209 = vrot.slane %v2167, 5
        %v2210 = vrot.slane %v2209, 4
        %v2211 = vrot.slane %v2168, 5
        %v2212 = vsel %vm1597, %v2210, %v2211
        %v2213 = vrot.slane %v2169, 5
        %v2214 = vrot.slane %v2213, 4
        %v2215 = vrot.slane %v2170, 5
        %v2216 = vsel %vm1597, %v2214, %v2215
        %v2217 = vrot.slane %v2171, 5
        %v2218 = vrot.slane %v2217, 4
        %v2219 = vrot.slane %v2172, 5
        %v2220 = vsel %vm1597, %v2218, %v2219
        %v2221 = vunpack.c.l.b16 %v2192
        %v2222 = vunpack.c.l.b16 %v2196
        %v2223 = vunpack.c.l.b16 %v2200
        %v2224 = vunpack.c.l.b16 %v2204
        %v2225 = vunpack.c.l.b16 %v2208
        %v2226 = vunpack.c.l.b16 %v2212
        %v2227 = vunpack.c.l.b16 %v2216
        %v2228 = vunpack.c.l.b16 %v2220
        %v2229 = vpack.c.b16 %v2222, %v2221
        %v2230 = vpack.c.b16 %v2224, %v2223
        %v2231 = vpack.c.b16 %v2226, %v2225
        %v2232 = vpack.c.b16 %v2228, %v2227
        %2237 = vst.msk [vmem:[#allocation4 + $0x8] sm:$0xff] %vm1401, %v2229
        %2238 = vst.msk [vmem:[#allocation4 + $0x18] sm:$0xff] %vm1401, %v2230
        %2239 = vst.msk [vmem:[#allocation4 + $0x28] sm:$0xff] %vm1401, %v2231
        %2240 = vst.msk [vmem:[#allocation4 + $0x38] sm:$0xff] %vm1401, %v2232
        %v2241 = vld [vmem:[#allocation4] sm:$0xff]
        %v2242 = vld [vmem:[#allocation4 + $0x8] sm:$0xff]
        %v2243 = vld [vmem:[#allocation4 + $0x10] sm:$0xff]
        %v2244 = vld [vmem:[#allocation4 + $0x18] sm:$0xff]
        %v2245 = vld [vmem:[#allocation4 + $0x20] sm:$0xff]
        %v2246 = vld [vmem:[#allocation4 + $0x28] sm:$0xff]
        %v2247 = vld [vmem:[#allocation4 + $0x30] sm:$0xff]
        %v2248 = vld [vmem:[#allocation4 + $0x38] sm:$0xff]
        %v2249 = vld [vmem:[#allocation11] sm:$0xf]
        %v2250 = vld [vmem:[#allocation11 + $0x4] sm:$0xf]
        %v2251 = vld [vmem:[#allocation11 + $0x8] sm:$0xf]
        %v2252 = vld [vmem:[#allocation11 + $0xc] sm:$0xf]
        %v2253 = vld [vmem:[#allocation11 + $0x10] sm:$0xf]
        %v2254 = vld [vmem:[#allocation11 + $0x14] sm:$0xf]
        %v2255 = vld [vmem:[#allocation11 + $0x18] sm:$0xf]
        %v2256 = vld [vmem:[#allocation11 + $0x1c] sm:$0xf]
        %v2257 = vld [vmem:[#allocation11 + $0x20] sm:$0xf]
        %v2258 = vld [vmem:[#allocation11 + $0x24] sm:$0xf]
        %v2259 = vld [vmem:[#allocation11 + $0x28] sm:$0xf]
        %v2260 = vld [vmem:[#allocation11 + $0x2c] sm:$0xf]
        %v2261 = vld [vmem:[#allocation11 + $0x30] sm:$0xf]
        %v2262 = vld [vmem:[#allocation11 + $0x34] sm:$0xf]
        %v2263 = vld [vmem:[#allocation11 + $0x38] sm:$0xf]
        %v2264 = vld [vmem:[#allocation11 + $0x3c] sm:$0xf]
        %v2265 = vld [vmem:[#allocation11 + $0x40] sm:$0xf]
        %v2266 = vld [vmem:[#allocation11 + $0x44] sm:$0xf]
        %v2267 = vld [vmem:[#allocation13] sm:$0x1]
        %v2269 = vlaneseq
        %v2270 = vshrl.u32 %v2269, 7
        %v2271 = vsub.s32 0, %v2270
        %v2272 = vrot.slane %v2267, %v2271
        %v2292 = vunpack.c.l.b16 %v2249
        %v2293 = vunpack.c.l.b16 %v2250
        %v2294 = vunpack.c.l.b16 %v2251
        %v2295 = vunpack.c.l.b16 %v2252
        %v2296 = vunpack.c.l.b16 %v2253
        %v2297 = vunpack.c.l.b16 %v2254
        %v2298 = vunpack.c.l.b16 %v2255
        %v2299 = vunpack.c.l.b16 %v2256
        %v2300 = vunpack.c.l.b16 %v2257
        %v2301 = vunpack.c.l.b16 %v2258
        %v2302 = vunpack.c.l.b16 %v2259
        %v2303 = vunpack.c.l.b16 %v2260
        %v2304 = vunpack.c.l.b16 %v2261
        %v2305 = vunpack.c.l.b16 %v2262
        %v2306 = vunpack.c.l.b16 %v2263
        %v2307 = vunpack.c.l.b16 %v2264
        %v2308 = vunpack.c.l.b16 %v2265
        %v2309 = vunpack.c.l.b16 %v2266
        %v2310 = vpack.c.b16 %v2293, %v2292
        %v2311 = vpack.c.b16 %v2295, %v2294
        %v2312 = vpack.c.b16 %v2297, %v2296
        %v2313 = vpack.c.b16 %v2299, %v2298
        %v2314 = vpack.c.b16 %v2301, %v2300
        %v2315 = vpack.c.b16 %v2303, %v2302
        %v2316 = vpack.c.b16 %v2305, %v2304
        %v2317 = vpack.c.b16 %v2307, %v2306
        %v2318 = vpack.c.b16 %v2309, %v2308
        %v2329 = vsel %vm1401, %v2242, 0
        %v2332 = vsel %vm1401, %v2244, 0
        %v2335 = vsel %vm1401, %v2246, 0
        %v2338 = vsel %vm1401, %v2248, 0
        %2340 = vmatprep.subr.bf16.mxu0 0
        %2341 = vmatpush1.bf16.msra.mxu0 %v2310
        %2342 = vmatprep.subr.bf16.mxu0 0
        %2343 = vmatpush1.bf16.msra.mxu0 %v2311
        %2344 = vmatprep.subr.bf16.mxu0 0
        %2345 = vmatpush1.bf16.msra.mxu0 %v2312
        %2346 = vmatprep.subr.bf16.mxu0 0
        %2347 = vmatpush1.bf16.msra.mxu0 %v2313
        %2348 = vmatprep.subr.bf16.mxu0 0
        %2349 = vmatpush1.bf16.msra.mxu0 %v2314
        %2350 = vmatprep.subr.bf16.mxu0 0
        %2351 = vmatpush1.bf16.msra.mxu0 %v2315
        %2352 = vmatprep.subr.bf16.mxu0 0
        %2353 = vmatpush1.bf16.msra.mxu0 %v2316
        %2354 = vmatprep.subr.bf16.mxu0 0
        %2355 = vmatpush1.bf16.msra.mxu0 %v2317
        %2356 = vmatprep.subr.bf16.mxu0 0
        %2357 = vmatpush1.bf16.msra.mxu0 %v2318
        %2358 = vmatprep.subr.bf16.mxu0 0
        %2359 = vmatpush1.bf16.msra.mxu0 0
        %2360 = vmatprep.subr.bf16.mxu0 0
        %2361 = vmatpush1.bf16.msra.mxu0 0
        %2362 = vmatprep.subr.bf16.mxu0 0
        %2363 = vmatpush1.bf16.msra.mxu0 0
        %2364 = vmatprep.subr.bf16.mxu0 0
        %2365 = vmatpush1.bf16.msra.mxu0 0
        %2366 = vmatprep.subr.bf16.mxu0 0
        %2367 = vmatpush1.bf16.msra.mxu0 0
        %2368 = vmatprep.subr.bf16.mxu0 0
        %2369 = vmatpush1.bf16.msra.mxu0 0
        %2370 = vmatprep.subr.bf16.mxu0 0
        %2371 = vmatpush1.bf16.msra.mxu0 0
        %2372 = vmatprep.mubr.bf16.mxu0 %v2329
        %2373 = vmatmul.mubr.bf16.gmra.mrb[0].mxu0 %v2241
        %v2374 = vpop.f32.mrb[0].mxu0
        %v2375 = vadd.f32 %v2272, %v2374
        %v2376 = vpop.f32.mrb[0].mxu0
        %v2377 = vpop.f32.mrb[0].mxu0
        %v2378 = vadd.f32 %v2272, %v2377
        %v2379 = vpop.f32.mrb[0].mxu0
        %2380 = vmatprep.mubr.bf16.mxu0 %v2332
        %2381 = vmatmul.mubr.bf16.gmra.mrb[0].mxu0 %v2243
        %v2382 = vpop.f32.mrb[0].mxu0
        %v2383 = vadd.f32 %v2272, %v2382
        %v2384 = vpop.f32.mrb[0].mxu0
        %v2385 = vpop.f32.mrb[0].mxu0
        %v2386 = vadd.f32 %v2272, %v2385
        %v2387 = vpop.f32.mrb[0].mxu0
        %2388 = vmatprep.mubr.bf16.mxu0 %v2335
        %2389 = vmatmul.mubr.bf16.gmra.mrb[0].mxu0 %v2245
        %v2390 = vpop.f32.mrb[0].mxu0
        %v2391 = vadd.f32 %v2272, %v2390
        %v2392 = vpop.f32.mrb[0].mxu0
        %v2393 = vpop.f32.mrb[0].mxu0
        %v2394 = vadd.f32 %v2272, %v2393
        %v2395 = vpop.f32.mrb[0].mxu0
        %2396 = vmatprep.mubr.bf16.mxu0 %v2338
        %2397 = vmatmul.mubr.bf16.gmra.mrb[0].mxu0 %v2247
        %v2398 = vpop.f32.mrb[0].mxu0
        %v2399 = vadd.f32 %v2272, %v2398
        %v2400 = vpop.f32.mrb[0].mxu0
        %v2401 = vpop.f32.mrb[0].mxu0
        %v2402 = vadd.f32 %v2272, %v2401
        %v2403 = vpop.f32.mrb[0].mxu0
        %2404 = vdwg.mxu0
        %2413 = vrot.lane.b32.xlu0 %v1164, 112
        %v2414 = vpop.permute.xlu0 %2413
        %2415 = vrot.lane.b32.xlu0 %v1167, 112
        %v2416 = vpop.permute.xlu0 %2415
        %2417 = vrot.lane.b32.xlu0 %v1172, 112
        %v2418 = vpop.permute.xlu0 %2417
        %2419 = vrot.lane.b32.xlu0 %v1175, 112
        %v2420 = vpop.permute.xlu0 %2419
        %2421 = vrot.lane.b32.xlu0 %v1180, 112
        %v2422 = vpop.permute.xlu0 %2421
        %2423 = vrot.lane.b32.xlu0 %v1183, 112
        %v2424 = vpop.permute.xlu0 %2423
        %2425 = vrot.lane.b32.xlu0 %v1188, 112
        %v2426 = vpop.permute.xlu0 %2425
        %2427 = vrot.lane.b32.xlu0 %v1191, 112
        %v2428 = vpop.permute.xlu0 %2427
        %v2437 = vadd.f32 %v2375, %v2414
        %v2438 = vadd.f32 %v2378, %v2416
        %v2439 = vadd.f32 %v2383, %v2418
        %v2440 = vadd.f32 %v2386, %v2420
        %v2441 = vadd.f32 %v2391, %v2422
        %v2442 = vadd.f32 %v2394, %v2424
        %v2443 = vadd.f32 %v2399, %v2426
        %v2444 = vadd.f32 %v2402, %v2428
        %v2445 = vmax.f32 %v2437, 0.0
        %v2446 = vmax.f32 %v2438, 0.0
        %v2447 = vmax.f32 %v2439, 0.0
        %v2448 = vmax.f32 %v2440, 0.0
        %v2449 = vmax.f32 %v2441, 0.0
        %v2450 = vmax.f32 %v2442, 0.0
        %v2451 = vmax.f32 %v2443, 0.0
        %v2452 = vmax.f32 %v2444, 0.0
        %2453 = vxpose.xlu0.b32.start [1/16] %v2445, 128
        %2454 = vxpose.xlu0.b32.cont [2/16] %v2446, 128
        %2455 = vxpose.xlu0.b32.cont [3/16] %v2447, 128
        %2456 = vxpose.xlu0.b32.cont [4/16] %v2448, 128
        %2457 = vxpose.xlu0.b32.cont [5/16] %v2449, 128
        %2458 = vxpose.xlu0.b32.cont [6/16] %v2450, 128
        %2459 = vxpose.xlu0.b32.cont [7/16] %v2451, 128
        %2460 = vxpose.xlu0.b32.cont [8/16] %v2452, 128
        %2461 = vxpose.xlu0.b32.cont [9/16] 0.0, 128
        %2462 = vxpose.xlu0.b32.cont [10/16] 0.0, 128
        %2463 = vxpose.xlu0.b32.cont [11/16] 0.0, 128
        %2464 = vxpose.xlu0.b32.cont [12/16] 0.0, 128
        %2465 = vxpose.xlu0.b32.cont [13/16] 0.0, 128
        %2466 = vxpose.xlu0.b32.cont [14/16] 0.0, 128
        %2467 = vxpose.xlu0.b32.cont [15/16] 0.0, 128
        %2468 = vxpose.xlu0.b32.end [16/16] 0.0, 128
        %v2469 = vpop.trf.xlu0
        %v2470 = vpop.trf.xlu0
        %v2471 = vpop.trf.xlu0
        %v2472 = vpop.trf.xlu0
        %v2473 = vpop.trf.xlu0
        %v2474 = vpop.trf.xlu0
        %v2475 = vpop.trf.xlu0
        %v2476 = vpop.trf.xlu0
        %v2477 = vpop.trf.xlu0
        %v2478 = vpop.trf.xlu0
        %v2479 = vpop.trf.xlu0
        %v2480 = vpop.trf.xlu0
        %v2481 = vpop.trf.xlu0
        %v2482 = vpop.trf.xlu0
        %v2483 = vpop.trf.xlu0
        %v2484 = vpop.trf.xlu0
        %vm2485 = vcmask 523264
        %2486 = vst.msk [vmem:[%s296] sm:$0xff] %vm2485, %v2469
        %2487 = vst.msk [vmem:[%s296 + $0x8] sm:$0xff] %vm2485, %v2470
        %s2488 = sand.u32 %s142, 1
        %s2489 = scalar_lea.sflag [#allocation7], %s2488
        %s2490 = sand.u32 %s142, 1
        %s2491 = smul.addr %s2490, 16
        %s2492 = scalar_lea.vmem [#allocation14], %s2491
        // Predicated region
        $region65: #{tpu_custom_call.1} parent=39 // pred_check
          %p2493 = pneg %p152
        $region66: #{tpu_custom_call.1} parent=39 // pred_check_branch
          %2495 = sbr.rel (%p2493) target = $region68
        $region67: #{tpu_custom_call.1} parent=39 // pred_region
          %s2497 = ssub.s32 256, 256
          %2498 = vsyncadd %s2489, %s2497
          %s2499 = smul.addr %s24, 2
          %s2500 = smul.addr %s2499, 128
          %s2501 = scalar_lea.hbm %s5, %s2500
          %s2502 = sshll.u32 %s2492, 4
          %s2503 = int_to_ptr.vmem [resolvable:$true] %s2502
          %2508 = dma.vmem_to_hbm [thread:$0]  %s2503, 256, %s2501, %s2489, 128, 128, 8
        $region68: #{tpu_custom_call.1} parent=39 // pred_fallthru
          _
      $region40: #{tpu_custom_call.1} parent=5 // pred_fallthru
        _
      %p2509 = scmp.le.s32.totalorder 2, %s19
      // Predicated region
      $region69: #{tpu_custom_call.1} parent=5 // pred_check
        %p2510 = pneg %p2509
      $region70: #{tpu_custom_call.1} parent=5 // pred_check_branch
        %2512 = sbr.rel (%p2510) target = $region72
      $region71: #{tpu_custom_call.1} parent=5 // pred_region
        %s2513 = ssub.s32 %s19, 2
        // Predicated region
        $region73: #{tpu_custom_call.1} parent=71 // pred_check
          %p2514 = pneg %p158
        $region74: #{tpu_custom_call.1} parent=71 // pred_check_branch
          %2516 = sbr.rel (%p2514) target = $region76
        $region75: #{tpu_custom_call.1} parent=71 // pred_region
          %s2517 = sand.u32 %s143, 1
          %s2518 = scalar_lea.sflag [#allocation7], %s2517
          %s2519 = sand.u32 %s143, 1
          %s2520 = smul.addr %s2519, 16
          %s2521 = scalar_lea.vmem [#allocation14], %s2520
          %2522 = dma.done %s2518, 256
        $region76: #{tpu_custom_call.1} parent=71 // pred_fallthru
          _
      $region72: #{tpu_custom_call.1} parent=5 // pred_fallthru
        _
    $region6: #{tpu_custom_call.1} parent=1 // loop_footer
      %s23 = sadd.s32 1, %s19
    $region7: #{tpu_custom_call.1} parent=1 // loop_footer_branch
      %18 = sbr.rel target = $region3
    $region8: #{tpu_custom_call.1} parent=1 // loop_exit
      _
    %2523 = vsyncpa [#allocation6], 1
    %s2524 = scalar_lea.sflag [#allocation6], 1
    %2525 = vsyncpa %s2524, 1
    %2526 = vsyncpa [#allocation9], 1
    %2527 = vsyncpa [#allocation12], 1
    %2528 = vsyncpa [#allocation7], 1
    %s2529 = scalar_lea.sflag [#allocation7], 1
    %2530 = vsyncpa %s2529, 1

</llo_original>
